<compile_context>
chip_gen: v6e
topology: v6e:2x2x1
jax: 0.10.0
libtpu: 0.0.40
codegen_flags: <defaults>
</compile_context>

<pallas_src>
import functools

import jax
import jax.numpy as jnp
from jax.experimental import pallas as pl
from jax.experimental.pallas import tpu as pltpu

_LANE = 128
_SUBLANE = 8


def _round_up(x, m):
    return (x + m - 1) // m * m


# ----------------------------------------------------------------------------
# Pallas kernel: one time-chunk of the (fused fwd+bwd) LSTM recurrence.
# ----------------------------------------------------------------------------
def _bilstm_chunk_kernel(gxf_ref, gxb_ref, whhf_ref, whhb_ref,
                         outf_ref, outb_ref,
                         hf_scr, cf_scr, hb_scr, cb_scr):
    """gxf/gxb : (Tc, Bp, G4) bf16  precomputed x @ W_ih^T + (b_ih + b_hh).
                 gxb is already time-reversed by the wrapper, so BOTH
                 directions walk local time s = 0..Tc-1 with static offsets.
       whhf/b  : (H, G4) bf16       hidden->gate weights (gate-packed).
       outf/b  : (Tc, Bp, H) bf16   hidden state per step (bwd in reversed t).
       h*/c*   : (Bp, H) scratch    recurrent carry; persists across chunks.
    """
    chunk = pl.program_id(0)
    Tc = gxf_ref.shape[0]
    H = outf_ref.shape[-1]

    @pl.when(chunk == 0)
    def _():
        hf_scr[...] = jnp.zeros_like(hf_scr)
        cf_scr[...] = jnp.zeros_like(cf_scr)
        hb_scr[...] = jnp.zeros_like(hb_scr)
        cb_scr[...] = jnp.zeros_like(cb_scr)

    def gate_math(gates, c):
        # Gates packed contiguously: [i | f | g | o], each H lanes (f32 math).
        i = jax.nn.sigmoid(gates[:, 0 * H:1 * H])
        f = jax.nn.sigmoid(gates[:, 1 * H:2 * H])
        g = jnp.tanh(gates[:, 2 * H:3 * H])
        o = jax.nn.sigmoid(gates[:, 3 * H:4 * H])
        c = f * c + i * g                       # f32 cell state
        h = o * jnp.tanh(c)
        return h.astype(jnp.bfloat16), c        # h carried/stored in bf16

    def step(s, carry):
        hf, cf, hb, cb = carry
        # W_hh read from VMEM inside the step (not hoisted into a long-lived
        # value); bf16 operands, f32 accumulation on the MXU.
        gates_f = gxf_ref[s].astype(jnp.float32) + jnp.dot(
            hf, whhf_ref[...], preferred_element_type=jnp.float32)
        gates_b = gxb_ref[s].astype(jnp.float32) + jnp.dot(
            hb, whhb_ref[...], preferred_element_type=jnp.float32)
        # Two independent chains interleaved in one body -> 2x ILP per step.
        hf, cf = gate_math(gates_f, cf)
        hb, cb = gate_math(gates_b, cb)
        outf_ref[s] = hf
        outb_ref[s] = hb
        return hf, cf, hb, cb

    carry0 = (hf_scr[...], cf_scr[...], hb_scr[...], cb_scr[...])
    # Small unroll (not full): enough scheduler visibility to overlap the dot,
    # EUP gates and the previous step's store without exploding i-mem/vregs.
    hf, cf, hb, cb = jax.lax.fori_loop(0, Tc, step, carry0,
                                       unroll=min(4, Tc))
    hf_scr[...] = hf
    cf_scr[...] = cf
    hb_scr[...] = hb
    cb_scr[...] = cb


def _bilstm_layer(gxf, gxb, whh_f, whh_b, *, hidden, time_chunk):
    """Run both LSTM directions for one layer over all time chunks.

    Returns (out_f, out_b): (T, Bp, H) bf16; out_b is in kernel-local
    (reversed) time order — the caller flips it back."""
    T, Bp, G4 = gxf.shape
    H = hidden
    Tc = min(time_chunk, T)
    n_chunks = pl.cdiv(T, Tc)
    Tp = n_chunks * Tc
    if Tp != T:
        # Pad kernel-local time at the end; padded steps only affect the
        # (unused) final carry and padded output rows, which are sliced off.
        pad = ((0, Tp - T), (0, 0), (0, 0))
        gxf = jnp.pad(gxf, pad)
        gxb = jnp.pad(gxb, pad)

    bf16 = 2
    # VMEM footprint of the chunked pipeline: double-buffered gx/out blocks,
    # both W_hh, and the carry scratch — with headroom.  v5e scoped default is
    # only 16 MiB, so set the limit explicitly (kept <= 64 MiB for v7x).
    block_bytes = (2 * 2 * Tc * Bp * G4 * bf16        # gxf+gxb, double-buffered
                   + 2 * 2 * Tc * Bp * H * bf16       # outf+outb, double-buffered
                   + 2 * 2 * H * G4 * bf16            # whh_f + whh_b
                   + 2 * Bp * H * (2 + 4))            # h (bf16) + c (f32) scratch
    vmem_limit = int(min(max(4 * block_bytes, 32 << 20), 64 << 20))

    cost = pl.CostEstimate(
        flops=2 * 2 * Tp * Bp * H * 4 * H,            # two directions of h@W_hh
        transcendentals=2 * Tp * Bp * 5 * H,          # 3 sigmoid + 2 tanh / dir
        bytes_accessed=(2 * Tp * Bp * G4 + 2 * Tp * Bp * H + 2 * H * G4) * bf16,
    )

    out_f, out_b = pl.pallas_call(
        _bilstm_chunk_kernel,
        out_shape=(jax.ShapeDtypeStruct((Tp, Bp, H), jnp.bfloat16),
                   jax.ShapeDtypeStruct((Tp, Bp, H), jnp.bfloat16)),
        grid_spec=pltpu.PrefetchScalarGridSpec(
            num_scalar_prefetch=0,
            grid=(n_chunks,),
            in_specs=[
                pl.BlockSpec((Tc, Bp, G4), lambda c: (c, 0, 0)),
                pl.BlockSpec((Tc, Bp, G4), lambda c: (c, 0, 0)),
                pl.BlockSpec((H, G4), lambda c: (0, 0)),
                pl.BlockSpec((H, G4), lambda c: (0, 0)),
            ],
            out_specs=[
                pl.BlockSpec((Tc, Bp, H), lambda c: (c, 0, 0)),
                pl.BlockSpec((Tc, Bp, H), lambda c: (c, 0, 0)),
            ],
            scratch_shapes=[
                pltpu.VMEM((Bp, H), jnp.bfloat16),    # h forward
                pltpu.VMEM((Bp, H), jnp.float32),     # c forward
                pltpu.VMEM((Bp, H), jnp.bfloat16),    # h backward
                pltpu.VMEM((Bp, H), jnp.float32),     # c backward
            ],
        ),
        compiler_params=pltpu.CompilerParams(
            # Chunks carry h/c through scratch -> must run sequentially.
            dimension_semantics=("arbitrary",),
            vmem_limit_bytes=vmem_limit,
        ),
        cost_estimate=cost,
    )(gxf, gxb, whh_f, whh_b)
    return out_f[:T], out_b[:T]


# ----------------------------------------------------------------------------
# Raw parameters (PyTorch nn.Embedding / nn.LSTM shapes).
# ----------------------------------------------------------------------------
def init_bilstm_params(key, vocab_size, hidden_dim, emb_dim):
    keys = jax.random.split(key, 1 + 2 * 2 * 4)
    kit = iter(keys)
    params = {"emb": jax.random.normal(next(kit), (vocab_size, emb_dim),
                                       jnp.float32) * 0.1}

    def make_dir(input_size):
        s = 0.1
        return {
            "w_ih": jax.random.normal(next(kit), (4 * hidden_dim, input_size),
                                      jnp.float32) * s,
            "w_hh": jax.random.normal(next(kit), (4 * hidden_dim, hidden_dim),
                                      jnp.float32) * s,
            "b_ih": jax.random.normal(next(kit), (4 * hidden_dim,),
                                      jnp.float32) * s,
            "b_hh": jax.random.normal(next(kit), (4 * hidden_dim,),
                                      jnp.float32) * s,
        }

    layers = []
    for layer in range(2):
        input_size = emb_dim if layer == 0 else 2 * hidden_dim
        layers.append({"fwd": make_dir(input_size), "bwd": make_dir(input_size)})
    params["layers"] = layers
    return params


# ----------------------------------------------------------------------------
# One-time layout prep: transpose, pack gates [i|f|g|o] (each H lanes, total
# width rounded up to a 128-lane multiple), fold the two biases, cast the
# matmul operands to bf16.
# ----------------------------------------------------------------------------
def prepare_params(raw, hidden_dim):
    H = hidden_dim
    assert H % _SUBLANE == 0, "hidden_dim must be a multiple of 8"
    G4 = _round_up(4 * H, _LANE)

    def pack_cols(m):                      # (D, 4H) -> (D, G4): zero-pad cols
        return jnp.pad(m, ((0, 0), (0, G4 - 4 * H)))

    prepped = {"emb": jnp.asarray(raw["emb"], jnp.float32), "layers": []}
    for layer in raw["layers"]:
        wih, whh, bias = [], [], []
        for d in ("fwd", "bwd"):
            p = layer[d]
            wih.append(pack_cols(jnp.asarray(p["w_ih"], jnp.float32).T)
                       .astype(jnp.bfloat16))                       # (Din, G4)
            whh.append(pack_cols(jnp.asarray(p["w_hh"], jnp.float32).T)
                       .astype(jnp.bfloat16))                       # (H, G4)
            bias.append(pack_cols((p["b_ih"] + p["b_hh"])[None, :])[0])  # (G4,)
        prepped["layers"].append({
            "wih": jnp.stack(wih),                         # (2, Din, G4) bf16
            "whh": jnp.stack(whh),                         # (2, H, G4)  bf16
            "bias": jnp.stack(bias).astype(jnp.float32),   # (2, G4)     f32
        })
    return prepped


# ----------------------------------------------------------------------------
# Forward pass (== PyTorch: embedding -> 2-layer biLSTM -> hdn[-1]).
# ----------------------------------------------------------------------------
def bilstm_forward(prepped, seq, *, hidden_dim, time_chunk=4):
    """seq: (T, B) int32 token ids -> feature (B, 2*hidden_dim) f32."""
    H = hidden_dim
    T, B = seq.shape
    Bp = _round_up(B, _SUBLANE)
    # NOTE: with B=2 the MXU M-dim is starved (Bp=8); batching more sequences
    # (Bp -> 128/256) is the production lever, not something to fix here.

    x = prepped["emb"][seq]                                  # (T, B, E) gather
    x = jnp.pad(x, ((0, 0), (0, Bp - B), (0, 0))).astype(jnp.bfloat16)

    def gx_for(xin, wih, bias):
        # Hoisted, non-recurrent input projection: one batched bf16 MXU matmul
        # over all T steps (off the serial critical path), f32 accumulation.
        g = jnp.einsum("tbd,dg->tbg", xin, wih,
                       preferred_element_type=jnp.float32) + bias
        return g.astype(jnp.bfloat16)

    for lp in prepped["layers"]:
        gxf = gx_for(x, lp["wih"][0], lp["bias"][0])          # (T, Bp, G4)
        gxb = gx_for(x, lp["wih"][1], lp["bias"][1])[::-1]    # pre-flip time
        out_f, out_b = _bilstm_layer(gxf, gxb, lp["whh"][0], lp["whh"][1],
                                     hidden=H, time_chunk=time_chunk)
        # out_b is in reversed time; flip back and concat -> next-layer input
        x = jnp.concatenate([out_f, out_b[::-1]], axis=-1)    # (T, Bp, 2H)

    # hdn[-1] = [h_fwd(T-1) | h_bwd at position T-1]
    return x[-1, :B, :].astype(jnp.float32)


# ----------------------------------------------------------------------------
# Pure-JAX f32 reference (lax.scan on the raw PyTorch-layout weights).
# ----------------------------------------------------------------------------
def _ref_lstm_direction(x, w_ih, w_hh, b_ih, b_hh, reverse):
    H = w_hh.shape[1]
    xs = x[::-1] if reverse else x

    def step(carry, xt):
        h, c = carry
        gates = xt @ w_ih.T + h @ w_hh.T + b_ih + b_hh
        i = jax.nn.sigmoid(gates[:, 0 * H:1 * H])
        f = jax.nn.sigmoid(gates[:, 1 * H:2 * H])
        g = jnp.tanh(gates[:, 2 * H:3 * H])
        o = jax.nn.sigmoid(gates[:, 3 * H:4 * H])
        c = f * c + i * g
        h = o * jnp.tanh(c)
        return (h, c), h

    B = x.shape[1]
    h0 = jnp.zeros((B, H), jnp.float32)
    c0 = jnp.zeros((B, H), jnp.float32)
    _, hs = jax.lax.scan(step, (h0, c0), xs)
    return hs[::-1] if reverse else hs


def _ref_forward(params, seq):
    x = params["emb"][seq]
    for layer in params["layers"]:
        h_f = _ref_lstm_direction(x, layer["fwd"]["w_ih"], layer["fwd"]["w_hh"],
                                  layer["fwd"]["b_ih"], layer["fwd"]["b_hh"],
                                  reverse=False)
        h_b = _ref_lstm_direction(x, layer["bwd"]["w_ih"], layer["bwd"]["w_hh"],
                                  layer["bwd"]["b_ih"], layer["bwd"]["b_hh"],
                                  reverse=True)
        x = jnp.concatenate([h_f, h_b], axis=-1)
    return x[-1]


if __name__ == "__main__":
    VOCAB, HIDDEN, EMB = 50, 32, 16
    T, B = 8, 2

    key = jax.random.PRNGKey(0)
    k_params, k_seq = jax.random.split(key)

    raw_params = init_bilstm_params(k_params, VOCAB, HIDDEN, EMB)
    seq = jax.random.randint(k_seq, (T, B), 0, VOCAB, dtype=jnp.int32)

    prepped = prepare_params(raw_params, HIDDEN)      # one-time layout prep
    fwd = jax.jit(functools.partial(bilstm_forward, hidden_dim=HIDDEN,
                                    time_chunk=4))

    feature = jax.block_until_ready(fwd(prepped, seq))
    assert feature.shape == (B, 2 * HIDDEN), feature.shape

    ref = jax.block_until_ready(_ref_forward(raw_params, seq))
    max_err = float(jnp.max(jnp.abs(feature - ref)))
    # bf16 weights/activations (f32 accumulation) vs the f32 scan reference.
    assert jnp.allclose(feature, ref, rtol=2e-2, atol=2e-2), max_err

    print("KERNEL_OK")
</pallas_src>

<mosaic_0001>
module attributes {stable_mosaic.version = 11 : i64} {
  func.func @_bilstm_chunk_kernel(%arg0: i32, %arg1: memref<4x8x128xbf16, #tpu.memory_space<vmem>>, %arg2: memref<4x8x128xbf16, #tpu.memory_space<vmem>>, %arg3: memref<32x128xbf16, #tpu.memory_space<vmem>>, %arg4: memref<32x128xbf16, #tpu.memory_space<vmem>>, %arg5: memref<4x8x32xbf16, #tpu.memory_space<vmem>>, %arg6: memref<4x8x32xbf16, #tpu.memory_space<vmem>>, %arg7: memref<8x32xbf16, #tpu.memory_space<vmem>>, %arg8: memref<8x32xf32, #tpu.memory_space<vmem>>, %arg9: memref<8x32xbf16, #tpu.memory_space<vmem>>, %arg10: memref<8x32xf32, #tpu.memory_space<vmem>>) attributes {dimension_semantics = [#tpu.dimension_semantics<arbitrary>], iteration_bounds = array<i64: 2>, scalar_prefetch = 0 : i64, scratch_operands = 4 : i64, tpu.core_type = #tpu.core_type<tc>, window_params = [{transform_indices = @transform_0, window_bounds = array<i64: 4, 8, 128>}, {transform_indices = @transform_1, window_bounds = array<i64: 4, 8, 128>}, {pipeline_mode = #tpu.pipeline_mode<synchronous>, transform_indices = @transform_2, window_bounds = array<i64: 32, 128>}, {pipeline_mode = #tpu.pipeline_mode<synchronous>, transform_indices = @transform_3, window_bounds = array<i64: 32, 128>}, {transform_indices = @transform_4, window_bounds = array<i64: 4, 8, 32>}, {transform_indices = @transform_5, window_bounds = array<i64: 4, 8, 32>}]} {
    %c0_i32 = arith.constant 0 : i32
    %0 = arith.cmpi eq, %arg0, %c0_i32 : i32
    %1 = arith.extui %0 : i1 to i32
    %c0_i32_0 = arith.constant 0 : i32
    %2 = arith.cmpi ne, %1, %c0_i32_0 : i32
    scf.if %2 {
      %cst_96 = arith.constant 0.000000e+00 : bf16
      %307 = vector.broadcast %cst_96 : bf16 to vector<8x32xbf16>
      %c0_97 = arith.constant 0 : index
      %c0_98 = arith.constant 0 : index
      %308 = vector.load %arg7[%c0_97, %c0_98] : memref<8x32xbf16, #tpu.memory_space<vmem>>, vector<8x32xbf16>
      tpu.vector_store %arg7[%c0_97, %c0_98], %307 {strides = array<i32>} : memref<8x32xbf16, #tpu.memory_space<vmem>>, vector<8x32xbf16>,
      %cst_99 = arith.constant 0.000000e+00 : f32
      %309 = vector.broadcast %cst_99 : f32 to vector<8x32xf32>
      %c0_100 = arith.constant 0 : index
      %c0_101 = arith.constant 0 : index
      %310 = vector.load %arg8[%c0_100, %c0_101] : memref<8x32xf32, #tpu.memory_space<vmem>>, vector<8x32xf32>
      tpu.vector_store %arg8[%c0_100, %c0_101], %309 {strides = array<i32>} : memref<8x32xf32, #tpu.memory_space<vmem>>, vector<8x32xf32>,
      %cst_102 = arith.constant 0.000000e+00 : bf16
      %311 = vector.broadcast %cst_102 : bf16 to vector<8x32xbf16>
      %c0_103 = arith.constant 0 : index
      %c0_104 = arith.constant 0 : index
      %312 = vector.load %arg9[%c0_103, %c0_104] : memref<8x32xbf16, #tpu.memory_space<vmem>>, vector<8x32xbf16>
      tpu.vector_store %arg9[%c0_103, %c0_104], %311 {strides = array<i32>} : memref<8x32xbf16, #tpu.memory_space<vmem>>, vector<8x32xbf16>,
      %cst_105 = arith.constant 0.000000e+00 : f32
      %313 = vector.broadcast %cst_105 : f32 to vector<8x32xf32>
      %c0_106 = arith.constant 0 : index
      %c0_107 = arith.constant 0 : index
      %314 = vector.load %arg10[%c0_106, %c0_107] : memref<8x32xf32, #tpu.memory_space<vmem>>, vector<8x32xf32>
      tpu.vector_store %arg10[%c0_106, %c0_107], %313 {strides = array<i32>} : memref<8x32xf32, #tpu.memory_space<vmem>>, vector<8x32xf32>,
    } else {
    }
    %c0 = arith.constant 0 : index
    %c0_1 = arith.constant 0 : index
    %3 = vector.load %arg7[%c0, %c0_1] : memref<8x32xbf16, #tpu.memory_space<vmem>>, vector<8x32xbf16>
    %c0_2 = arith.constant 0 : index
    %c0_3 = arith.constant 0 : index
    %4 = vector.load %arg8[%c0_2, %c0_3] : memref<8x32xf32, #tpu.memory_space<vmem>>, vector<8x32xf32>
    %c0_4 = arith.constant 0 : index
    %c0_5 = arith.constant 0 : index
    %5 = vector.load %arg9[%c0_4, %c0_5] : memref<8x32xbf16, #tpu.memory_space<vmem>>, vector<8x32xbf16>
    %c0_6 = arith.constant 0 : index
    %c0_7 = arith.constant 0 : index
    %6 = vector.load %arg10[%c0_6, %c0_7] : memref<8x32xf32, #tpu.memory_space<vmem>>, vector<8x32xf32>
    %c0_i32_8 = arith.constant 0 : i32
    %7 = arith.index_cast %c0_i32_8 : i32 to index
    %c0_9 = arith.constant 0 : index
    %c0_10 = arith.constant 0 : index
    %8 = vector.load %arg1[%7, %c0_9, %c0_10] : memref<4x8x128xbf16, #tpu.memory_space<vmem>>, vector<1x8x128xbf16>
    %9 = vector.shape_cast %8 : vector<1x8x128xbf16> to vector<8x128xbf16>
    %10 = arith.extf %9 : vector<8x128xbf16> to vector<8x128xf32>
    %c0_11 = arith.constant 0 : index
    %c0_12 = arith.constant 0 : index
    %11 = vector.load %arg3[%c0_11, %c0_12] : memref<32x128xbf16, #tpu.memory_space<vmem>>, vector<32x128xbf16>
    %cst = arith.constant dense<0.000000e+00> : vector<8x128xf32>
    %12 = tpu.matmul %3, %11, %cst {dimension_numbers = #tpu.dot_dimension_numbers<[1], [0], [0], [1], [0, 0, 1, 1], [], []>} : vector<8x32xbf16>, vector<32x128xbf16>, vector<8x128xf32> -> vector<8x128xf32>
    %13 = arith.addf %10, %12 : vector<8x128xf32>
    %14 = arith.index_cast %c0_i32_8 : i32 to index
    %c0_13 = arith.constant 0 : index
    %c0_14 = arith.constant 0 : index
    %15 = vector.load %arg2[%14, %c0_13, %c0_14] : memref<4x8x128xbf16, #tpu.memory_space<vmem>>, vector<1x8x128xbf16>
    %16 = vector.shape_cast %15 : vector<1x8x128xbf16> to vector<8x128xbf16>
    %17 = arith.extf %16 : vector<8x128xbf16> to vector<8x128xf32>
    %c0_15 = arith.constant 0 : index
    %c0_16 = arith.constant 0 : index
    %18 = vector.load %arg4[%c0_15, %c0_16] : memref<32x128xbf16, #tpu.memory_space<vmem>>, vector<32x128xbf16>
    %cst_17 = arith.constant dense<0.000000e+00> : vector<8x128xf32>
    %19 = tpu.matmul %5, %18, %cst_17 {dimension_numbers = #tpu.dot_dimension_numbers<[1], [0], [0], [1], [0, 0, 1, 1], [], []>} : vector<8x32xbf16>, vector<32x128xbf16>, vector<8x128xf32> -> vector<8x128xf32>
    %20 = arith.addf %17, %19 : vector<8x128xf32>
    %21 = vector.extract_strided_slice %13 {offsets = [0, 0], sizes = [8, 32], strides = [1, 1]} : vector<8x128xf32> to vector<8x32xf32>
    %22 = arith.negf %21 : vector<8x32xf32>
    %23 = math.exp %22 : vector<8x32xf32>
    %cst_18 = arith.constant 1.000000e+00 : f32
    %24 = vector.broadcast %cst_18 : f32 to vector<8x32xf32>
    %25 = arith.addf %24, %23 : vector<8x32xf32>
    %26 = arith.divf %24, %25 : vector<8x32xf32>
    %27 = vector.extract_strided_slice %13 {offsets = [0, 32], sizes = [8, 32], strides = [1, 1]} : vector<8x128xf32> to vector<8x32xf32>
    %28 = arith.negf %27 : vector<8x32xf32>
    %29 = math.exp %28 : vector<8x32xf32>
    %cst_19 = arith.constant 1.000000e+00 : f32
    %30 = vector.broadcast %cst_19 : f32 to vector<8x32xf32>
    %31 = arith.addf %30, %29 : vector<8x32xf32>
    %32 = arith.divf %30, %31 : vector<8x32xf32>
    %33 = vector.extract_strided_slice %13 {offsets = [0, 64], sizes = [8, 32], strides = [1, 1]} : vector<8x128xf32> to vector<8x32xf32>
    %34 = math.tanh %33 : vector<8x32xf32>
    %35 = vector.extract_strided_slice %13 {offsets = [0, 96], sizes = [8, 32], strides = [1, 1]} : vector<8x128xf32> to vector<8x32xf32>
    %36 = arith.negf %35 : vector<8x32xf32>
    %37 = math.exp %36 : vector<8x32xf32>
    %cst_20 = arith.constant 1.000000e+00 : f32
    %38 = vector.broadcast %cst_20 : f32 to vector<8x32xf32>
    %39 = arith.addf %38, %37 : vector<8x32xf32>
    %40 = arith.divf %38, %39 : vector<8x32xf32>
    %41 = arith.mulf %32, %4 : vector<8x32xf32>
    %42 = arith.mulf %26, %34 : vector<8x32xf32>
    %43 = arith.addf %41, %42 : vector<8x32xf32>
    %44 = math.tanh %43 : vector<8x32xf32>
    %45 = arith.mulf %40, %44 : vector<8x32xf32>
    %46 = arith.truncf %45 : vector<8x32xf32> to vector<8x32xbf16>
    %47 = vector.extract_strided_slice %20 {offsets = [0, 0], sizes = [8, 32], strides = [1, 1]} : vector<8x128xf32> to vector<8x32xf32>
    %48 = arith.negf %47 : vector<8x32xf32>
    %49 = math.exp %48 : vector<8x32xf32>
    %cst_21 = arith.constant 1.000000e+00 : f32
    %50 = vector.broadcast %cst_21 : f32 to vector<8x32xf32>
    %51 = arith.addf %50, %49 : vector<8x32xf32>
    %52 = arith.divf %50, %51 : vector<8x32xf32>
    %53 = vector.extract_strided_slice %20 {offsets = [0, 32], sizes = [8, 32], strides = [1, 1]} : vector<8x128xf32> to vector<8x32xf32>
    %54 = arith.negf %53 : vector<8x32xf32>
    %55 = math.exp %54 : vector<8x32xf32>
    %cst_22 = arith.constant 1.000000e+00 : f32
    %56 = vector.broadcast %cst_22 : f32 to vector<8x32xf32>
    %57 = arith.addf %56, %55 : vector<8x32xf32>
    %58 = arith.divf %56, %57 : vector<8x32xf32>
    %59 = vector.extract_strided_slice %20 {offsets = [0, 64], sizes = [8, 32], strides = [1, 1]} : vector<8x128xf32> to vector<8x32xf32>
    %60 = math.tanh %59 : vector<8x32xf32>
    %61 = vector.extract_strided_slice %20 {offsets = [0, 96], sizes = [8, 32], strides = [1, 1]} : vector<8x128xf32> to vector<8x32xf32>
    %62 = arith.negf %61 : vector<8x32xf32>
    %63 = math.exp %62 : vector<8x32xf32>
    %cst_23 = arith.constant 1.000000e+00 : f32
    %64 = vector.broadcast %cst_23 : f32 to vector<8x32xf32>
    %65 = arith.addf %64, %63 : vector<8x32xf32>
    %66 = arith.divf %64, %65 : vector<8x32xf32>
    %67 = arith.mulf %58, %6 : vector<8x32xf32>
    %68 = arith.mulf %52, %60 : vector<8x32xf32>
    %69 = arith.addf %67, %68 : vector<8x32xf32>
    %70 = math.tanh %69 : vector<8x32xf32>
    %71 = arith.mulf %66, %70 : vector<8x32xf32>
    %72 = arith.truncf %71 : vector<8x32xf32> to vector<8x32xbf16>
    %73 = arith.index_cast %c0_i32_8 : i32 to index
    %c0_24 = arith.constant 0 : index
    %c0_25 = arith.constant 0 : index
    %74 = vector.load %arg5[%73, %c0_24, %c0_25] : memref<4x8x32xbf16, #tpu.memory_space<vmem>>, vector<1x8x32xbf16>
    %75 = vector.shape_cast %74 : vector<1x8x32xbf16> to vector<8x32xbf16>
    %76 = vector.shape_cast %46 : vector<8x32xbf16> to vector<1x8x32xbf16>
    tpu.vector_store %arg5[%73, %c0_24, %c0_25], %76 {strides = array<i32>} : memref<4x8x32xbf16, #tpu.memory_space<vmem>>, vector<1x8x32xbf16>,
    %77 = arith.index_cast %c0_i32_8 : i32 to index
    %c0_26 = arith.constant 0 : index
    %c0_27 = arith.constant 0 : index
    %78 = vector.load %arg6[%77, %c0_26, %c0_27] : memref<4x8x32xbf16, #tpu.memory_space<vmem>>, vector<1x8x32xbf16>
    %79 = vector.shape_cast %78 : vector<1x8x32xbf16> to vector<8x32xbf16>
    %80 = vector.shape_cast %72 : vector<8x32xbf16> to vector<1x8x32xbf16>
    tpu.vector_store %arg6[%77, %c0_26, %c0_27], %80 {strides = array<i32>} : memref<4x8x32xbf16, #tpu.memory_space<vmem>>, vector<1x8x32xbf16>,
    %c1_i32 = arith.constant 1 : i32
    %81 = arith.index_cast %c1_i32 : i32 to index
    %c0_28 = arith.constant 0 : index
    %c0_29 = arith.constant 0 : index
    %82 = vector.load %arg1[%81, %c0_28, %c0_29] : memref<4x8x128xbf16, #tpu.memory_space<vmem>>, vector<1x8x128xbf16>
    %83 = vector.shape_cast %82 : vector<1x8x128xbf16> to vector<8x128xbf16>
    %84 = arith.extf %83 : vector<8x128xbf16> to vector<8x128xf32>
    %c0_30 = arith.constant 0 : index
    %c0_31 = arith.constant 0 : index
    %85 = vector.load %arg3[%c0_30, %c0_31] : memref<32x128xbf16, #tpu.memory_space<vmem>>, vector<32x128xbf16>
    %cst_32 = arith.constant dense<0.000000e+00> : vector<8x128xf32>
    %86 = tpu.matmul %46, %85, %cst_32 {dimension_numbers = #tpu.dot_dimension_numbers<[1], [0], [0], [1], [0, 0, 1, 1], [], []>} : vector<8x32xbf16>, vector<32x128xbf16>, vector<8x128xf32> -> vector<8x128xf32>
    %87 = arith.addf %84, %86 : vector<8x128xf32>
    %88 = arith.index_cast %c1_i32 : i32 to index
    %c0_33 = arith.constant 0 : index
    %c0_34 = arith.constant 0 : index
    %89 = vector.load %arg2[%88, %c0_33, %c0_34] : memref<4x8x128xbf16, #tpu.memory_space<vmem>>, vector<1x8x128xbf16>
    %90 = vector.shape_cast %89 : vector<1x8x128xbf16> to vector<8x128xbf16>
    %91 = arith.extf %90 : vector<8x128xbf16> to vector<8x128xf32>
    %c0_35 = arith.constant 0 : index
    %c0_36 = arith.constant 0 : index
    %92 = vector.load %arg4[%c0_35, %c0_36] : memref<32x128xbf16, #tpu.memory_space<vmem>>, vector<32x128xbf16>
    %cst_37 = arith.constant dense<0.000000e+00> : vector<8x128xf32>
    %93 = tpu.matmul %72, %92, %cst_37 {dimension_numbers = #tpu.dot_dimension_numbers<[1], [0], [0], [1], [0, 0, 1, 1], [], []>} : vector<8x32xbf16>, vector<32x128xbf16>, vector<8x128xf32> -> vector<8x128xf32>
    %94 = arith.addf %91, %93 : vector<8x128xf32>
    %95 = vector.extract_strided_slice %87 {offsets = [0, 0], sizes = [8, 32], strides = [1, 1]} : vector<8x128xf32> to vector<8x32xf32>
    %96 = arith.negf %95 : vector<8x32xf32>
    %97 = math.exp %96 : vector<8x32xf32>
    %cst_38 = arith.constant 1.000000e+00 : f32
    %98 = vector.broadcast %cst_38 : f32 to vector<8x32xf32>
    %99 = arith.addf %98, %97 : vector<8x32xf32>
    %100 = arith.divf %98, %99 : vector<8x32xf32>
    %101 = vector.extract_strided_slice %87 {offsets = [0, 32], sizes = [8, 32], strides = [1, 1]} : vector<8x128xf32> to vector<8x32xf32>
    %102 = arith.negf %101 : vector<8x32xf32>
    %103 = math.exp %102 : vector<8x32xf32>
    %cst_39 = arith.constant 1.000000e+00 : f32
    %104 = vector.broadcast %cst_39 : f32 to vector<8x32xf32>
    %105 = arith.addf %104, %103 : vector<8x32xf32>
    %106 = arith.divf %104, %105 : vector<8x32xf32>
    %107 = vector.extract_strided_slice %87 {offsets = [0, 64], sizes = [8, 32], strides = [1, 1]} : vector<8x128xf32> to vector<8x32xf32>
    %108 = math.tanh %107 : vector<8x32xf32>
    %109 = vector.extract_strided_slice %87 {offsets = [0, 96], sizes = [8, 32], strides = [1, 1]} : vector<8x128xf32> to vector<8x32xf32>
    %110 = arith.negf %109 : vector<8x32xf32>
    %111 = math.exp %110 : vector<8x32xf32>
    %cst_40 = arith.constant 1.000000e+00 : f32
    %112 = vector.broadcast %cst_40 : f32 to vector<8x32xf32>
    %113 = arith.addf %112, %111 : vector<8x32xf32>
    %114 = arith.divf %112, %113 : vector<8x32xf32>
    %115 = arith.mulf %106, %43 : vector<8x32xf32>
    %116 = arith.mulf %100, %108 : vector<8x32xf32>
    %117 = arith.addf %115, %116 : vector<8x32xf32>
    %118 = math.tanh %117 : vector<8x32xf32>
    %119 = arith.mulf %114, %118 : vector<8x32xf32>
    %120 = arith.truncf %119 : vector<8x32xf32> to vector<8x32xbf16>
    %121 = vector.extract_strided_slice %94 {offsets = [0, 0], sizes = [8, 32], strides = [1, 1]} : vector<8x128xf32> to vector<8x32xf32>
    %122 = arith.negf %121 : vector<8x32xf32>
    %123 = math.exp %122 : vector<8x32xf32>
    %cst_41 = arith.constant 1.000000e+00 : f32
    %124 = vector.broadcast %cst_41 : f32 to vector<8x32xf32>
    %125 = arith.addf %124, %123 : vector<8x32xf32>
    %126 = arith.divf %124, %125 : vector<8x32xf32>
    %127 = vector.extract_strided_slice %94 {offsets = [0, 32], sizes = [8, 32], strides = [1, 1]} : vector<8x128xf32> to vector<8x32xf32>
    %128 = arith.negf %127 : vector<8x32xf32>
    %129 = math.exp %128 : vector<8x32xf32>
    %cst_42 = arith.constant 1.000000e+00 : f32
    %130 = vector.broadcast %cst_42 : f32 to vector<8x32xf32>
    %131 = arith.addf %130, %129 : vector<8x32xf32>
    %132 = arith.divf %130, %131 : vector<8x32xf32>
    %133 = vector.extract_strided_slice %94 {offsets = [0, 64], sizes = [8, 32], strides = [1, 1]} : vector<8x128xf32> to vector<8x32xf32>
    %134 = math.tanh %133 : vector<8x32xf32>
    %135 = vector.extract_strided_slice %94 {offsets = [0, 96], sizes = [8, 32], strides = [1, 1]} : vector<8x128xf32> to vector<8x32xf32>
    %136 = arith.negf %135 : vector<8x32xf32>
    %137 = math.exp %136 : vector<8x32xf32>
    %cst_43 = arith.constant 1.000000e+00 : f32
    %138 = vector.broadcast %cst_43 : f32 to vector<8x32xf32>
    %139 = arith.addf %138, %137 : vector<8x32xf32>
    %140 = arith.divf %138, %139 : vector<8x32xf32>
    %141 = arith.mulf %132, %69 : vector<8x32xf32>
    %142 = arith.mulf %126, %134 : vector<8x32xf32>
    %143 = arith.addf %141, %142 : vector<8x32xf32>
    %144 = math.tanh %143 : vector<8x32xf32>
    %145 = arith.mulf %140, %144 : vector<8x32xf32>
    %146 = arith.truncf %145 : vector<8x32xf32> to vector<8x32xbf16>
    %147 = arith.index_cast %c1_i32 : i32 to index
    %c0_44 = arith.constant 0 : index
    %c0_45 = arith.constant 0 : index
    %148 = vector.load %arg5[%147, %c0_44, %c0_45] : memref<4x8x32xbf16, #tpu.memory_space<vmem>>, vector<1x8x32xbf16>
    %149 = vector.shape_cast %148 : vector<1x8x32xbf16> to vector<8x32xbf16>
    %150 = vector.shape_cast %120 : vector<8x32xbf16> to vector<1x8x32xbf16>
    tpu.vector_store %arg5[%147, %c0_44, %c0_45], %150 {strides = array<i32>} : memref<4x8x32xbf16, #tpu.memory_space<vmem>>, vector<1x8x32xbf16>,
    %151 = arith.index_cast %c1_i32 : i32 to index
    %c0_46 = arith.constant 0 : index
    %c0_47 = arith.constant 0 : index
    %152 = vector.load %arg6[%151, %c0_46, %c0_47] : memref<4x8x32xbf16, #tpu.memory_space<vmem>>, vector<1x8x32xbf16>
    %153 = vector.shape_cast %152 : vector<1x8x32xbf16> to vector<8x32xbf16>
    %154 = vector.shape_cast %146 : vector<8x32xbf16> to vector<1x8x32xbf16>
    tpu.vector_store %arg6[%151, %c0_46, %c0_47], %154 {strides = array<i32>} : memref<4x8x32xbf16, #tpu.memory_space<vmem>>, vector<1x8x32xbf16>,
    %c2_i32 = arith.constant 2 : i32
    %155 = arith.index_cast %c2_i32 : i32 to index
    %c0_48 = arith.constant 0 : index
    %c0_49 = arith.constant 0 : index
    %156 = vector.load %arg1[%155, %c0_48, %c0_49] : memref<4x8x128xbf16, #tpu.memory_space<vmem>>, vector<1x8x128xbf16>
    %157 = vector.shape_cast %156 : vector<1x8x128xbf16> to vector<8x128xbf16>
    %158 = arith.extf %157 : vector<8x128xbf16> to vector<8x128xf32>
    %c0_50 = arith.constant 0 : index
    %c0_51 = arith.constant 0 : index
    %159 = vector.load %arg3[%c0_50, %c0_51] : memref<32x128xbf16, #tpu.memory_space<vmem>>, vector<32x128xbf16>
    %cst_52 = arith.constant dense<0.000000e+00> : vector<8x128xf32>
    %160 = tpu.matmul %120, %159, %cst_52 {dimension_numbers = #tpu.dot_dimension_numbers<[1], [0], [0], [1], [0, 0, 1, 1], [], []>} : vector<8x32xbf16>, vector<32x128xbf16>, vector<8x128xf32> -> vector<8x128xf32>
    %161 = arith.addf %158, %160 : vector<8x128xf32>
    %162 = arith.index_cast %c2_i32 : i32 to index
    %c0_53 = arith.constant 0 : index
    %c0_54 = arith.constant 0 : index
    %163 = vector.load %arg2[%162, %c0_53, %c0_54] : memref<4x8x128xbf16, #tpu.memory_space<vmem>>, vector<1x8x128xbf16>
    %164 = vector.shape_cast %163 : vector<1x8x128xbf16> to vector<8x128xbf16>
    %165 = arith.extf %164 : vector<8x128xbf16> to vector<8x128xf32>
    %c0_55 = arith.constant 0 : index
    %c0_56 = arith.constant 0 : index
    %166 = vector.load %arg4[%c0_55, %c0_56] : memref<32x128xbf16, #tpu.memory_space<vmem>>, vector<32x128xbf16>
    %cst_57 = arith.constant dense<0.000000e+00> : vector<8x128xf32>
    %167 = tpu.matmul %146, %166, %cst_57 {dimension_numbers = #tpu.dot_dimension_numbers<[1], [0], [0], [1], [0, 0, 1, 1], [], []>} : vector<8x32xbf16>, vector<32x128xbf16>, vector<8x128xf32> -> vector<8x128xf32>
    %168 = arith.addf %165, %167 : vector<8x128xf32>
    %169 = vector.extract_strided_slice %161 {offsets = [0, 0], sizes = [8, 32], strides = [1, 1]} : vector<8x128xf32> to vector<8x32xf32>
    %170 = arith.negf %169 : vector<8x32xf32>
    %171 = math.exp %170 : vector<8x32xf32>
    %cst_58 = arith.constant 1.000000e+00 : f32
    %172 = vector.broadcast %cst_58 : f32 to vector<8x32xf32>
    %173 = arith.addf %172, %171 : vector<8x32xf32>
    %174 = arith.divf %172, %173 : vector<8x32xf32>
    %175 = vector.extract_strided_slice %161 {offsets = [0, 32], sizes = [8, 32], strides = [1, 1]} : vector<8x128xf32> to vector<8x32xf32>
    %176 = arith.negf %175 : vector<8x32xf32>
    %177 = math.exp %176 : vector<8x32xf32>
    %cst_59 = arith.constant 1.000000e+00 : f32
    %178 = vector.broadcast %cst_59 : f32 to vector<8x32xf32>
    %179 = arith.addf %178, %177 : vector<8x32xf32>
    %180 = arith.divf %178, %179 : vector<8x32xf32>
    %181 = vector.extract_strided_slice %161 {offsets = [0, 64], sizes = [8, 32], strides = [1, 1]} : vector<8x128xf32> to vector<8x32xf32>
    %182 = math.tanh %181 : vector<8x32xf32>
    %183 = vector.extract_strided_slice %161 {offsets = [0, 96], sizes = [8, 32], strides = [1, 1]} : vector<8x128xf32> to vector<8x32xf32>
    %184 = arith.negf %183 : vector<8x32xf32>
    %185 = math.exp %184 : vector<8x32xf32>
    %cst_60 = arith.constant 1.000000e+00 : f32
    %186 = vector.broadcast %cst_60 : f32 to vector<8x32xf32>
    %187 = arith.addf %186, %185 : vector<8x32xf32>
    %188 = arith.divf %186, %187 : vector<8x32xf32>
    %189 = arith.mulf %180, %117 : vector<8x32xf32>
    %190 = arith.mulf %174, %182 : vector<8x32xf32>
    %191 = arith.addf %189, %190 : vector<8x32xf32>
    %192 = math.tanh %191 : vector<8x32xf32>
    %193 = arith.mulf %188, %192 : vector<8x32xf32>
    %194 = arith.truncf %193 : vector<8x32xf32> to vector<8x32xbf16>
    %195 = vector.extract_strided_slice %168 {offsets = [0, 0], sizes = [8, 32], strides = [1, 1]} : vector<8x128xf32> to vector<8x32xf32>
    %196 = arith.negf %195 : vector<8x32xf32>
    %197 = math.exp %196 : vector<8x32xf32>
    %cst_61 = arith.constant 1.000000e+00 : f32
    %198 = vector.broadcast %cst_61 : f32 to vector<8x32xf32>
    %199 = arith.addf %198, %197 : vector<8x32xf32>
    %200 = arith.divf %198, %199 : vector<8x32xf32>
    %201 = vector.extract_strided_slice %168 {offsets = [0, 32], sizes = [8, 32], strides = [1, 1]} : vector<8x128xf32> to vector<8x32xf32>
    %202 = arith.negf %201 : vector<8x32xf32>
    %203 = math.exp %202 : vector<8x32xf32>
    %cst_62 = arith.constant 1.000000e+00 : f32
    %204 = vector.broadcast %cst_62 : f32 to vector<8x32xf32>
    %205 = arith.addf %204, %203 : vector<8x32xf32>
    %206 = arith.divf %204, %205 : vector<8x32xf32>
    %207 = vector.extract_strided_slice %168 {offsets = [0, 64], sizes = [8, 32], strides = [1, 1]} : vector<8x128xf32> to vector<8x32xf32>
    %208 = math.tanh %207 : vector<8x32xf32>
    %209 = vector.extract_strided_slice %168 {offsets = [0, 96], sizes = [8, 32], strides = [1, 1]} : vector<8x128xf32> to vector<8x32xf32>
    %210 = arith.negf %209 : vector<8x32xf32>
    %211 = math.exp %210 : vector<8x32xf32>
    %cst_63 = arith.constant 1.000000e+00 : f32
    %212 = vector.broadcast %cst_63 : f32 to vector<8x32xf32>
    %213 = arith.addf %212, %211 : vector<8x32xf32>
    %214 = arith.divf %212, %213 : vector<8x32xf32>
    %215 = arith.mulf %206, %143 : vector<8x32xf32>
    %216 = arith.mulf %200, %208 : vector<8x32xf32>
    %217 = arith.addf %215, %216 : vector<8x32xf32>
    %218 = math.tanh %217 : vector<8x32xf32>
    %219 = arith.mulf %214, %218 : vector<8x32xf32>
    %220 = arith.truncf %219 : vector<8x32xf32> to vector<8x32xbf16>
    %221 = arith.index_cast %c2_i32 : i32 to index
    %c0_64 = arith.constant 0 : index
    %c0_65 = arith.constant 0 : index
    %222 = vector.load %arg5[%221, %c0_64, %c0_65] : memref<4x8x32xbf16, #tpu.memory_space<vmem>>, vector<1x8x32xbf16>
    %223 = vector.shape_cast %222 : vector<1x8x32xbf16> to vector<8x32xbf16>
    %224 = vector.shape_cast %194 : vector<8x32xbf16> to vector<1x8x32xbf16>
    tpu.vector_store %arg5[%221, %c0_64, %c0_65], %224 {strides = array<i32>} : memref<4x8x32xbf16, #tpu.memory_space<vmem>>, vector<1x8x32xbf16>,
    %225 = arith.index_cast %c2_i32 : i32 to index
    %c0_66 = arith.constant 0 : index
    %c0_67 = arith.constant 0 : index
    %226 = vector.load %arg6[%225, %c0_66, %c0_67] : memref<4x8x32xbf16, #tpu.memory_space<vmem>>, vector<1x8x32xbf16>
    %227 = vector.shape_cast %226 : vector<1x8x32xbf16> to vector<8x32xbf16>
    %228 = vector.shape_cast %220 : vector<8x32xbf16> to vector<1x8x32xbf16>
    tpu.vector_store %arg6[%225, %c0_66, %c0_67], %228 {strides = array<i32>} : memref<4x8x32xbf16, #tpu.memory_space<vmem>>, vector<1x8x32xbf16>,
    %c3_i32 = arith.constant 3 : i32
    %229 = arith.index_cast %c3_i32 : i32 to index
    %c0_68 = arith.constant 0 : index
    %c0_69 = arith.constant 0 : index
    %230 = vector.load %arg1[%229, %c0_68, %c0_69] : memref<4x8x128xbf16, #tpu.memory_space<vmem>>, vector<1x8x128xbf16>
    %231 = vector.shape_cast %230 : vector<1x8x128xbf16> to vector<8x128xbf16>
    %232 = arith.extf %231 : vector<8x128xbf16> to vector<8x128xf32>
    %c0_70 = arith.constant 0 : index
    %c0_71 = arith.constant 0 : index
    %233 = vector.load %arg3[%c0_70, %c0_71] : memref<32x128xbf16, #tpu.memory_space<vmem>>, vector<32x128xbf16>
    %cst_72 = arith.constant dense<0.000000e+00> : vector<8x128xf32>
    %234 = tpu.matmul %194, %233, %cst_72 {dimension_numbers = #tpu.dot_dimension_numbers<[1], [0], [0], [1], [0, 0, 1, 1], [], []>} : vector<8x32xbf16>, vector<32x128xbf16>, vector<8x128xf32> -> vector<8x128xf32>
    %235 = arith.addf %232, %234 : vector<8x128xf32>
    %236 = arith.index_cast %c3_i32 : i32 to index
    %c0_73 = arith.constant 0 : index
    %c0_74 = arith.constant 0 : index
    %237 = vector.load %arg2[%236, %c0_73, %c0_74] : memref<4x8x128xbf16, #tpu.memory_space<vmem>>, vector<1x8x128xbf16>
    %238 = vector.shape_cast %237 : vector<1x8x128xbf16> to vector<8x128xbf16>
    %239 = arith.extf %238 : vector<8x128xbf16> to vector<8x128xf32>
    %c0_75 = arith.constant 0 : index
    %c0_76 = arith.constant 0 : index
    %240 = vector.load %arg4[%c0_75, %c0_76] : memref<32x128xbf16, #tpu.memory_space<vmem>>, vector<32x128xbf16>
    %cst_77 = arith.constant dense<0.000000e+00> : vector<8x128xf32>
    %241 = tpu.matmul %220, %240, %cst_77 {dimension_numbers = #tpu.dot_dimension_numbers<[1], [0], [0], [1], [0, 0, 1, 1], [], []>} : vector<8x32xbf16>, vector<32x128xbf16>, vector<8x128xf32> -> vector<8x128xf32>
    %242 = arith.addf %239, %241 : vector<8x128xf32>
    %243 = vector.extract_strided_slice %235 {offsets = [0, 0], sizes = [8, 32], strides = [1, 1]} : vector<8x128xf32> to vector<8x32xf32>
    %244 = arith.negf %243 : vector<8x32xf32>
    %245 = math.exp %244 : vector<8x32xf32>
    %cst_78 = arith.constant 1.000000e+00 : f32
    %246 = vector.broadcast %cst_78 : f32 to vector<8x32xf32>
    %247 = arith.addf %246, %245 : vector<8x32xf32>
    %248 = arith.divf %246, %247 : vector<8x32xf32>
    %249 = vector.extract_strided_slice %235 {offsets = [0, 32], sizes = [8, 32], strides = [1, 1]} : vector<8x128xf32> to vector<8x32xf32>
    %250 = arith.negf %249 : vector<8x32xf32>
    %251 = math.exp %250 : vector<8x32xf32>
    %cst_79 = arith.constant 1.000000e+00 : f32
    %252 = vector.broadcast %cst_79 : f32 to vector<8x32xf32>
    %253 = arith.addf %252, %251 : vector<8x32xf32>
    %254 = arith.divf %252, %253 : vector<8x32xf32>
    %255 = vector.extract_strided_slice %235 {offsets = [0, 64], sizes = [8, 32], strides = [1, 1]} : vector<8x128xf32> to vector<8x32xf32>
    %256 = math.tanh %255 : vector<8x32xf32>
    %257 = vector.extract_strided_slice %235 {offsets = [0, 96], sizes = [8, 32], strides = [1, 1]} : vector<8x128xf32> to vector<8x32xf32>
    %258 = arith.negf %257 : vector<8x32xf32>
    %259 = math.exp %258 : vector<8x32xf32>
    %cst_80 = arith.constant 1.000000e+00 : f32
    %260 = vector.broadcast %cst_80 : f32 to vector<8x32xf32>
    %261 = arith.addf %260, %259 : vector<8x32xf32>
    %262 = arith.divf %260, %261 : vector<8x32xf32>
    %263 = arith.mulf %254, %191 : vector<8x32xf32>
    %264 = arith.mulf %248, %256 : vector<8x32xf32>
    %265 = arith.addf %263, %264 : vector<8x32xf32>
    %266 = math.tanh %265 : vector<8x32xf32>
    %267 = arith.mulf %262, %266 : vector<8x32xf32>
    %268 = arith.truncf %267 : vector<8x32xf32> to vector<8x32xbf16>
    %269 = vector.extract_strided_slice %242 {offsets = [0, 0], sizes = [8, 32], strides = [1, 1]} : vector<8x128xf32> to vector<8x32xf32>
    %270 = arith.negf %269 : vector<8x32xf32>
    %271 = math.exp %270 : vector<8x32xf32>
    %cst_81 = arith.constant 1.000000e+00 : f32
    %272 = vector.broadcast %cst_81 : f32 to vector<8x32xf32>
    %273 = arith.addf %272, %271 : vector<8x32xf32>
    %274 = arith.divf %272, %273 : vector<8x32xf32>
    %275 = vector.extract_strided_slice %242 {offsets = [0, 32], sizes = [8, 32], strides = [1, 1]} : vector<8x128xf32> to vector<8x32xf32>
    %276 = arith.negf %275 : vector<8x32xf32>
    %277 = math.exp %276 : vector<8x32xf32>
    %cst_82 = arith.constant 1.000000e+00 : f32
    %278 = vector.broadcast %cst_82 : f32 to vector<8x32xf32>
    %279 = arith.addf %278, %277 : vector<8x32xf32>
    %280 = arith.divf %278, %279 : vector<8x32xf32>
    %281 = vector.extract_strided_slice %242 {offsets = [0, 64], sizes = [8, 32], strides = [1, 1]} : vector<8x128xf32> to vector<8x32xf32>
    %282 = math.tanh %281 : vector<8x32xf32>
    %283 = vector.extract_strided_slice %242 {offsets = [0, 96], sizes = [8, 32], strides = [1, 1]} : vector<8x128xf32> to vector<8x32xf32>
    %284 = arith.negf %283 : vector<8x32xf32>
    %285 = math.exp %284 : vector<8x32xf32>
    %cst_83 = arith.constant 1.000000e+00 : f32
    %286 = vector.broadcast %cst_83 : f32 to vector<8x32xf32>
    %287 = arith.addf %286, %285 : vector<8x32xf32>
    %288 = arith.divf %286, %287 : vector<8x32xf32>
    %289 = arith.mulf %280, %217 : vector<8x32xf32>
    %290 = arith.mulf %274, %282 : vector<8x32xf32>
    %291 = arith.addf %289, %290 : vector<8x32xf32>
    %292 = math.tanh %291 : vector<8x32xf32>
    %293 = arith.mulf %288, %292 : vector<8x32xf32>
    %294 = arith.truncf %293 : vector<8x32xf32> to vector<8x32xbf16>
    %295 = arith.index_cast %c3_i32 : i32 to index
    %c0_84 = arith.constant 0 : index
    %c0_85 = arith.constant 0 : index
    %296 = vector.load %arg5[%295, %c0_84, %c0_85] : memref<4x8x32xbf16, #tpu.memory_space<vmem>>, vector<1x8x32xbf16>
    %297 = vector.shape_cast %296 : vector<1x8x32xbf16> to vector<8x32xbf16>
    %298 = vector.shape_cast %268 : vector<8x32xbf16> to vector<1x8x32xbf16>
    tpu.vector_store %arg5[%295, %c0_84, %c0_85], %298 {strides = array<i32>} : memref<4x8x32xbf16, #tpu.memory_space<vmem>>, vector<1x8x32xbf16>,
    %299 = arith.index_cast %c3_i32 : i32 to index
    %c0_86 = arith.constant 0 : index
    %c0_87 = arith.constant 0 : index
    %300 = vector.load %arg6[%299, %c0_86, %c0_87] : memref<4x8x32xbf16, #tpu.memory_space<vmem>>, vector<1x8x32xbf16>
    %301 = vector.shape_cast %300 : vector<1x8x32xbf16> to vector<8x32xbf16>
    %302 = vector.shape_cast %294 : vector<8x32xbf16> to vector<1x8x32xbf16>
    tpu.vector_store %arg6[%299, %c0_86, %c0_87], %302 {strides = array<i32>} : memref<4x8x32xbf16, #tpu.memory_space<vmem>>, vector<1x8x32xbf16>,
    %c4_i32 = arith.constant 4 : i32
    %c0_88 = arith.constant 0 : index
    %c0_89 = arith.constant 0 : index
    %303 = vector.load %arg7[%c0_88, %c0_89] : memref<8x32xbf16, #tpu.memory_space<vmem>>, vector<8x32xbf16>
    tpu.vector_store %arg7[%c0_88, %c0_89], %268 {strides = array<i32>} : memref<8x32xbf16, #tpu.memory_space<vmem>>, vector<8x32xbf16>,
    %c0_90 = arith.constant 0 : index
    %c0_91 = arith.constant 0 : index
    %304 = vector.load %arg8[%c0_90, %c0_91] : memref<8x32xf32, #tpu.memory_space<vmem>>, vector<8x32xf32>
    tpu.vector_store %arg8[%c0_90, %c0_91], %265 {strides = array<i32>} : memref<8x32xf32, #tpu.memory_space<vmem>>, vector<8x32xf32>,
    %c0_92 = arith.constant 0 : index
    %c0_93 = arith.constant 0 : index
    %305 = vector.load %arg9[%c0_92, %c0_93] : memref<8x32xbf16, #tpu.memory_space<vmem>>, vector<8x32xbf16>
    tpu.vector_store %arg9[%c0_92, %c0_93], %294 {strides = array<i32>} : memref<8x32xbf16, #tpu.memory_space<vmem>>, vector<8x32xbf16>,
    %c0_94 = arith.constant 0 : index
    %c0_95 = arith.constant 0 : index
    %306 = vector.load %arg10[%c0_94, %c0_95] : memref<8x32xf32, #tpu.memory_space<vmem>>, vector<8x32xf32>
    tpu.vector_store %arg10[%c0_94, %c0_95], %291 {strides = array<i32>} : memref<8x32xf32, #tpu.memory_space<vmem>>, vector<8x32xf32>,
    return
  }
  func.func @transform_0(%arg0: i32) -> (i32, i32, i32) {
    %c0_i32 = arith.constant 0 : i32
    %c0_i32_0 = arith.constant 0 : i32
    %c0_i32_1 = arith.constant 0 : i32
    return %arg0, %c0_i32, %c0_i32_0 : i32, i32, i32
  }
  func.func @transform_1(%arg0: i32) -> (i32, i32, i32) {
    %c0_i32 = arith.constant 0 : i32
    %c0_i32_0 = arith.constant 0 : i32
    %c0_i32_1 = arith.constant 0 : i32
    return %arg0, %c0_i32, %c0_i32_0 : i32, i32, i32
  }
  func.func @transform_2(%arg0: i32) -> (i32, i32) {
    %c0_i32 = arith.constant 0 : i32
    %c0_i32_0 = arith.constant 0 : i32
    %c0_i32_1 = arith.constant 0 : i32
    return %c0_i32, %c0_i32_0 : i32, i32
  }
  func.func @transform_3(%arg0: i32) -> (i32, i32) {
    %c0_i32 = arith.constant 0 : i32
    %c0_i32_0 = arith.constant 0 : i32
    %c0_i32_1 = arith.constant 0 : i32
    return %c0_i32, %c0_i32_0 : i32, i32
  }
  func.func @transform_4(%arg0: i32) -> (i32, i32, i32) {
    %c0_i32 = arith.constant 0 : i32
    %c0_i32_0 = arith.constant 0 : i32
    %c0_i32_1 = arith.constant 0 : i32
    return %arg0, %c0_i32, %c0_i32_0 : i32, i32, i32
  }
  func.func @transform_5(%arg0: i32) -> (i32, i32, i32) {
    %c0_i32 = arith.constant 0 : i32
    %c0_i32_0 = arith.constant 0 : i32
    %c0_i32_1 = arith.constant 0 : i32
    return %arg0, %c0_i32, %c0_i32_0 : i32, i32, i32
  }
}

</mosaic_0001>

<llo_original>
// kernel: bilstm_forward.2
$region0: #{bilstm_forward.2}
  #allocation0 [shape = 'u32[]', space=smem, size = 0x4, offset = 0x4, fixed_abs, tag = 'smem constant byte address 0x4 - core index']
  #allocation1 [shape = 'u32[144,128]{1,0:T(1,128)}', space=vmem, size = 0x12000, scoped, tag = 'internal scratch']
  #allocation2 [shape = 'bf16[8,32]{1,0:T(8,128)(2,1)}', space=vmem, size = 0x800, scoped, tag = 'scratch operand']
  #allocation3 [shape = 'f32[8,32]{1,0:T(8,128)}', space=vmem, size = 0x1000, scoped, tag = 'scratch operand']
  #allocation4 [shape = 'bf16[8,32]{1,0:T(8,128)(2,1)}', space=vmem, size = 0x800, scoped, tag = 'scratch operand']
  #allocation5 [shape = 'f32[8,32]{1,0:T(8,128)}', space=vmem, size = 0x1000, scoped, tag = 'scratch operand']
  %s0 = inlined_call_operand.vmem [shape: bf16[8,8,128], index: 0, kind: input, shape index: {}]
  %s1 = inlined_call_operand.vmem [shape: bf16[8,8,128], index: 1, kind: input, shape index: {}]
  %s2 = inlined_call_operand.vmem [shape: bf16[32,128], index: 2, kind: input, shape index: {}]
  %s3 = inlined_call_operand.vmem [shape: bf16[32,128], index: 3, kind: input, shape index: {}]
  %s4 = inlined_call_operand.vmem [shape: bf16[8,8,32], index: 4, kind: output, shape index: {0}]
  %s5 = inlined_call_operand.vmem [shape: bf16[8,8,32], index: 5, kind: output, shape index: {1}]
  %6 = xla_tuple %s4, %s5
  %s7 = sld [smem:[#allocation0]]
  $region61: #{bilstm_forward.2} parent=0
    _
  %s9 = ssub.s32 1, %s7
  %s10 = scalar_select 0, %s9, %s7
  loop: start=0, step=1, limit=4
  $region2: #{bilstm_forward.2} parent=0 // loop_pre_header
    _
  $region3: #{bilstm_forward.2} parent=0 // loop_header
    %s12 = sphi 0, %s16
    %p13 = scmp.ge.s32.totalorder %s12, 4
    %s22 = sphi 0, %s24
    %s25 = sphi 0, %s22
    %s26 = sphi 0, %s25
    %s42 = sphi 0, %s26
    %s48 = sphi 0, %s50
    %s51 = sphi 0, %s48
    %s52 = sphi 0, %s51
    %s68 = sphi 0, %s52
    %s72 = sphi 0, %s72
    %s74 = sphi 0, %s72
    %s75 = sphi 0, %s74
    %s89 = sphi 0, %s75
    %s93 = sphi 0, %s93
    %s95 = sphi 0, %s93
    %s96 = sphi 0, %s95
    %s110 = sphi 0, %s96
    %s116 = sphi 0, %s118
    %s119 = sphi 0, %s116
    %s120 = sphi 0, %s119
    %s136 = sphi 0, %s120
    %s142 = sphi 0, %s144
    %s145 = sphi 0, %s142
    %s146 = sphi 0, %s145
    %s162 = sphi 0, %s146
  $region4: #{bilstm_forward.2} parent=0 // loop_header_branch
    %15 = sbr.rel (%p13) target = $region8
  $region5: #{bilstm_forward.2} parent=0 // loop_body
    %s17 = ssub.s32 %s12, 1
    %s18 = ssub.s32 %s12, 2
    %s19 = sadd.s32 %s12, 1
    %s20 = ssub.s32 %s12, %s19
    %p21 = scmp.eq.s32.totalorder %s20, 0
    %s23 = sadd.s32 %s22, 1
    %s24 = scalar_select %p21, %s22, %s23
    %p27 = pneg %p21
    %p28 = scmp.eq.s32.totalorder %s12, 1
    %p29 = por %p27, %p28
    %p30 = scmp.ne.s32.totalorder %s22, %s25
    %p31 = scmp.eq.s32.totalorder %s12, 0
    %p32 = por %p30, %p31
    %p33 = scmp.ne.s32.totalorder %s22, %s25
    %p34 = scmp.eq.s32.totalorder %s17, 1
    %p35 = por %p33, %p34
    %p36 = scmp.ne.s32.totalorder %s25, %s26
    %p37 = scmp.eq.s32.totalorder %s17, 0
    %p38 = por %p36, %p37
    %p39 = scmp.ne.s32.totalorder %s25, %s26
    %p40 = scmp.eq.s32.totalorder %s18, 1
    %p41 = por %p39, %p40
    %p43 = scmp.ne.s32.totalorder %s26, %s42
    %p44 = scmp.eq.s32.totalorder %s18, 0
    %p45 = por %p43, %p44
    %s46 = ssub.s32 %s12, %s19
    %p47 = scmp.eq.s32.totalorder %s46, 0
    %s49 = sadd.s32 %s48, 1
    %s50 = scalar_select %p47, %s48, %s49
    %p53 = pneg %p47
    %p54 = scmp.eq.s32.totalorder %s12, 1
    %p55 = por %p53, %p54
    %p56 = scmp.ne.s32.totalorder %s48, %s51
    %p57 = scmp.eq.s32.totalorder %s12, 0
    %p58 = por %p56, %p57
    %p59 = scmp.ne.s32.totalorder %s48, %s51
    %p60 = scmp.eq.s32.totalorder %s17, 1
    %p61 = por %p59, %p60
    %p62 = scmp.ne.s32.totalorder %s51, %s52
    %p63 = scmp.eq.s32.totalorder %s17, 0
    %p64 = por %p62, %p63
    %p65 = scmp.ne.s32.totalorder %s51, %s52
    %p66 = scmp.eq.s32.totalorder %s18, 1
    %p67 = por %p65, %p66
    %p69 = scmp.ne.s32.totalorder %s52, %s68
    %p70 = scmp.eq.s32.totalorder %s18, 0
    %p71 = por %p69, %p70
    %s73 = sadd.s32 %s72, 1
    %p76 = scmp.eq.s32.totalorder %s12, 1
    %p77 = scmp.ne.s32.totalorder %s72, %s74
    %p78 = scmp.eq.s32.totalorder %s12, 0
    %p79 = por %p77, %p78
    %p80 = scmp.ne.s32.totalorder %s72, %s74
    %p81 = scmp.eq.s32.totalorder %s17, 1
    %p82 = por %p80, %p81
    %p83 = scmp.ne.s32.totalorder %s74, %s75
    %p84 = scmp.eq.s32.totalorder %s17, 0
    %p85 = por %p83, %p84
    %p86 = scmp.ne.s32.totalorder %s74, %s75
    %p87 = scmp.eq.s32.totalorder %s18, 1
    %p88 = por %p86, %p87
    %p90 = scmp.ne.s32.totalorder %s75, %s89
    %p91 = scmp.eq.s32.totalorder %s18, 0
    %p92 = por %p90, %p91
    %s94 = sadd.s32 %s93, 1
    %p97 = scmp.eq.s32.totalorder %s12, 1
    %p98 = scmp.ne.s32.totalorder %s93, %s95
    %p99 = scmp.eq.s32.totalorder %s12, 0
    %p100 = por %p98, %p99
    %p101 = scmp.ne.s32.totalorder %s93, %s95
    %p102 = scmp.eq.s32.totalorder %s17, 1
    %p103 = por %p101, %p102
    %p104 = scmp.ne.s32.totalorder %s95, %s96
    %p105 = scmp.eq.s32.totalorder %s17, 0
    %p106 = por %p104, %p105
    %p107 = scmp.ne.s32.totalorder %s95, %s96
    %p108 = scmp.eq.s32.totalorder %s18, 1
    %p109 = por %p107, %p108
    %p111 = scmp.ne.s32.totalorder %s96, %s110
    %p112 = scmp.eq.s32.totalorder %s18, 0
    %p113 = por %p111, %p112
    %s114 = ssub.s32 %s12, %s19
    %p115 = scmp.eq.s32.totalorder %s114, 0
    %s117 = sadd.s32 %s116, 1
    %s118 = scalar_select %p115, %s116, %s117
    %p121 = pneg %p115
    %p122 = scmp.eq.s32.totalorder %s12, 1
    %p123 = por %p121, %p122
    %p124 = scmp.ne.s32.totalorder %s116, %s119
    %p125 = scmp.eq.s32.totalorder %s12, 0
    %p126 = por %p124, %p125
    %p127 = scmp.ne.s32.totalorder %s116, %s119
    %p128 = scmp.eq.s32.totalorder %s17, 1
    %p129 = por %p127, %p128
    %p130 = scmp.ne.s32.totalorder %s119, %s120
    %p131 = scmp.eq.s32.totalorder %s17, 0
    %p132 = por %p130, %p131
    %p133 = scmp.ne.s32.totalorder %s119, %s120
    %p134 = scmp.eq.s32.totalorder %s18, 1
    %p135 = por %p133, %p134
    %p137 = scmp.ne.s32.totalorder %s120, %s136
    %p138 = scmp.eq.s32.totalorder %s18, 0
    %p139 = por %p137, %p138
    %s140 = ssub.s32 %s12, %s19
    %p141 = scmp.eq.s32.totalorder %s140, 0
    %s143 = sadd.s32 %s142, 1
    %s144 = scalar_select %p141, %s142, %s143
    %p147 = pneg %p141
    %p148 = scmp.eq.s32.totalorder %s12, 1
    %p149 = por %p147, %p148
    %p150 = scmp.ne.s32.totalorder %s142, %s145
    %p151 = scmp.eq.s32.totalorder %s12, 0
    %p152 = por %p150, %p151
    %p153 = scmp.ne.s32.totalorder %s142, %s145
    %p154 = scmp.eq.s32.totalorder %s17, 1
    %p155 = por %p153, %p154
    %p156 = scmp.ne.s32.totalorder %s145, %s146
    %p157 = scmp.eq.s32.totalorder %s17, 0
    %p158 = por %p156, %p157
    %p159 = scmp.ne.s32.totalorder %s145, %s146
    %p160 = scmp.eq.s32.totalorder %s18, 1
    %p161 = por %p159, %p160
    %p163 = scmp.ne.s32.totalorder %s146, %s162
    %p164 = scmp.eq.s32.totalorder %s18, 0
    %p165 = por %p163, %p164
    %p166 = scmp.le.s32.totalorder 1, %s12
    %p167 = scmp.lt.s32.totalorder %s12, 3
    %p168 = pnand %p166, %p167
    %p169 = pneg %p168
    // Predicated region
    $region9: #{bilstm_forward.2} parent=5 // pred_check
      _
    $region10: #{bilstm_forward.2} parent=5 // pred_check_branch
      %171 = sbr.rel (%p168) target = $region12
    $region11: #{bilstm_forward.2} parent=5 // pred_region
      %s172 = ssub.s32 %s12, 1
      // Predicated region
      $region13: #{bilstm_forward.2} parent=11 // pred_check
        %p173 = pneg %p85
      $region14: #{bilstm_forward.2} parent=11 // pred_check_branch
        %175 = sbr.rel (%p173) target = $region16
      $region15: #{bilstm_forward.2} parent=11 // pred_region
        _
      $region16: #{bilstm_forward.2} parent=11 // pred_fallthru
        _
      // Predicated region
      $region17: #{bilstm_forward.2} parent=11 // pred_check
        %p176 = pneg %p106
      $region18: #{bilstm_forward.2} parent=11 // pred_check_branch
        %178 = sbr.rel (%p176) target = $region20
      $region19: #{bilstm_forward.2} parent=11 // pred_region
        _
      $region20: #{bilstm_forward.2} parent=11 // pred_fallthru
        _
    $region12: #{bilstm_forward.2} parent=5 // pred_fallthru
      _
    %p179 = scmp.lt.s32.totalorder %s12, 2
    // Predicated region
    $region21: #{bilstm_forward.2} parent=5 // pred_check
      %p180 = pneg %p179
    $region22: #{bilstm_forward.2} parent=5 // pred_check_branch
      %182 = sbr.rel (%p180) target = $region24
    $region23: #{bilstm_forward.2} parent=5 // pred_region
      // Predicated region
      $region25: #{bilstm_forward.2} parent=23 // pred_check
        %p183 = pneg %p32
      $region26: #{bilstm_forward.2} parent=23 // pred_check_branch
        %185 = sbr.rel (%p183) target = $region28
      $region27: #{bilstm_forward.2} parent=23 // pred_region
        %s186 = smul.u32 4, %s12
        %p187 = scmp.lt.s32.totalorder %s186, 7
        %s188 = scalar_select %p187, %s186, 7
        %s189 = smul.addr %s188, 4
        %s190 = scalar_lea.vmem %s0, %s189
        %s191 = smul.u32 4, %s12
      $region28: #{bilstm_forward.2} parent=23 // pred_fallthru
        _
      // Predicated region
      $region29: #{bilstm_forward.2} parent=23 // pred_check
        %p192 = pneg %p58
      $region30: #{bilstm_forward.2} parent=23 // pred_check_branch
        %194 = sbr.rel (%p192) target = $region32
      $region31: #{bilstm_forward.2} parent=23 // pred_region
        %s195 = smul.u32 4, %s12
        %p196 = scmp.lt.s32.totalorder %s195, 7
        %s197 = scalar_select %p196, %s195, 7
        %s198 = smul.addr %s197, 4
        %s199 = scalar_lea.vmem %s1, %s198
        %s200 = smul.u32 4, %s12
      $region32: #{bilstm_forward.2} parent=23 // pred_fallthru
        _
    $region24: #{bilstm_forward.2} parent=5 // pred_fallthru
      _
    %p201 = scmp.le.s32.totalorder 1, %s12
    %p202 = scmp.lt.s32.totalorder %s12, 3
    %p203 = pnand %p201, %p202
    %p204 = pneg %p203
    // Predicated region
    $region33: #{bilstm_forward.2} parent=5 // pred_check
      _
    $region34: #{bilstm_forward.2} parent=5 // pred_check_branch
      %206 = sbr.rel (%p203) target = $region36
    $region35: #{bilstm_forward.2} parent=5 // pred_region
      %s207 = ssub.s32 %s12, 1
      %s208 = smul.u32 4, %s17
      %p209 = scmp.lt.s32.totalorder %s208, 7
      %s210 = scalar_select %p209, %s208, 7
      %s211 = smul.addr %s210, 4
      %s212 = scalar_lea.vmem %s0, %s211
      %p213 = pneg %p38
      %p214 = pneg %p35
      %s215 = smul.u32 4, %s17
      %p216 = scmp.lt.s32.totalorder %s215, 7
      %s217 = scalar_select %p216, %s215, 7
      %s218 = smul.addr %s217, 4
      %s219 = scalar_lea.vmem %s1, %s218
      %p220 = pneg %p64
      %p221 = pneg %p61
      %p222 = pneg %p85
      %p223 = pneg %p82
      %p224 = pneg %p106
      %p225 = pneg %p103
      %p226 = pneg %p132
      %p227 = pneg %p129
      %s228 = smul.u32 4, %s17
      %p229 = scmp.lt.s32.totalorder %s228, 7
      %s230 = scalar_select %p229, %s228, 7
      %s231 = smul.addr %s230, 4
      %s232 = scalar_lea.vmem %s4, %s231
      %p233 = pneg %p158
      %p234 = pneg %p155
      %s235 = smul.u32 4, %s17
      %p236 = scmp.lt.s32.totalorder %s235, 7
      %s237 = scalar_select %p236, %s235, 7
      %s238 = smul.addr %s237, 4
      %s239 = scalar_lea.vmem %s5, %s238
      %s240 = smul.u32 4, %s17
      %p241 = scmp.lt.s32.totalorder %s240, 7
      %s242 = scalar_select %p241, %s240, 7
      %s243 = smul.addr %s242, 4
      %s244 = scalar_lea.vmem %s0, %s243
      %s245 = smul.u32 4, %s17
      %s246 = smul.u32 4, %s17
      %p247 = scmp.lt.s32.totalorder %s246, 7
      %s248 = scalar_select %p247, %s246, 7
      %s249 = smul.addr %s248, 4
      %s250 = scalar_lea.vmem %s1, %s249
      %s251 = smul.u32 4, %s17
      %s252 = smul.u32 4, %s17
      %p253 = scmp.lt.s32.totalorder %s252, 7
      %s254 = scalar_select %p253, %s252, 7
      %s255 = smul.addr %s254, 4
      %s256 = scalar_lea.vmem %s4, %s255
      %s257 = smul.u32 4, %s17
      %s258 = smul.u32 4, %s17
      %p259 = scmp.lt.s32.totalorder %s258, 7
      %s260 = scalar_select %p259, %s258, 7
      %s261 = smul.addr %s260, 4
      %s262 = scalar_lea.vmem %s5, %s261
      %s263 = smul.u32 4, %s17
      %p265 = scmp.eq.s32.totalorder %s17, 0
      // Predicated region
      $region37: #{bilstm_forward.2} parent=35 // pred_check
        %p266 = pneg %p265
      $region38: #{bilstm_forward.2} parent=35 // pred_check_branch
        %268 = sbr.rel (%p266) target = $region40
      $region39: #{bilstm_forward.2} parent=35 // pred_region
        %vm269 = vcmask 257024
        %270 = vst.msk [vmem:[#allocation2] sm:$0xf] %vm269, 0
        %vm271 = vcmask 261120
        %272 = vst.msk [vmem:[#allocation3] sm:$0xff] %vm271, 0.0
        %273 = vst.msk [vmem:[#allocation4] sm:$0xf] %vm269, 0
        %274 = vst.msk [vmem:[#allocation5] sm:$0xff] %vm271, 0.0
      $region40: #{bilstm_forward.2} parent=35 // pred_fallthru
        _
      %v275 = vld [vmem:[#allocation2] sm:$0xf]
      %v276 = vld [vmem:[#allocation3] sm:$0xff]
      %v277 = vld [vmem:[#allocation4] sm:$0xf]
      %v278 = vld [vmem:[#allocation5] sm:$0xff]
      %v279 = vld [vmem:[%s244] sm:$0xf]
      %v280 = vunpack.c.l.bf16 %v279
      %v281 = vld [vmem:[%s2] sm:$0xf]
      %v282 = vld [vmem:[%s2 + $0x4] sm:$0xf]
      %v283 = vld [vmem:[%s2 + $0x8] sm:$0xf]
      %v284 = vld [vmem:[%s2 + $0xc] sm:$0xf]
      %v289 = vunpack.c.l.b16 %v281
      %v290 = vunpack.c.l.b16 %v282
      %v291 = vunpack.c.l.b16 %v283
      %v292 = vunpack.c.l.b16 %v284
      %v293 = vpack.c.b16 %v290, %v289
      %v294 = vpack.c.b16 %v292, %v291
      %vm297 = vcmask 261120
      %v299 = vsel %vm297, %v275, 0
      %301 = vmatprep.subr.bf16.mxu0 0
      %302 = vmatpush1.bf16.msra.mxu0 0
      %303 = vmatprep.subr.bf16.mxu0 0
      %304 = vmatpush1.bf16.msra.mxu0 0
      %305 = vmatprep.subr.bf16.mxu0 0
      %306 = vmatpush1.bf16.msra.mxu0 0
      %307 = vmatprep.subr.bf16.mxu0 0
      %308 = vmatpush1.bf16.msra.mxu0 0
      %309 = vmatprep.subr.bf16.mxu0 0
      %310 = vmatpush1.bf16.msra.mxu0 0
      %311 = vmatprep.subr.bf16.mxu0 0
      %312 = vmatpush1.bf16.msra.mxu0 0
      %313 = vmatprep.subr.bf16.mxu0 0
      %314 = vmatpush1.bf16.msra.mxu0 %v294
      %315 = vmatprep.subr.bf16.mxu0 0
      %316 = vmatpush1.bf16.msra.mxu0 %v293
      %317 = vmatprep.subr.bf16.mxu0 0
      %318 = vmatpush2.bf16.msra.mxu0 0
      %319 = vmatprep.subr.bf16.mxu0 0
      %320 = vmatpush2.bf16.msra.mxu0 0
      %321 = vmatprep.subr.bf16.mxu0 0
      %322 = vmatpush2.bf16.msra.mxu0 0
      %323 = vmatprep.subr.bf16.mxu0 0
      %324 = vmatpush2.bf16.msra.mxu0 0
      %325 = vmatprep.subr.bf16.mxu0 0
      %326 = vmatpush2.bf16.msra.mxu0 0
      %327 = vmatprep.subr.bf16.mxu0 0
      %328 = vmatpush2.bf16.msra.mxu0 0
      %329 = vmatprep.subr.bf16.mxu0 0
      %330 = vmatpush2.bf16.msra.mxu0 0
      %331 = vmatprep.subr.bf16.mxu0 0
      %332 = vmatpush2.bf16.msra.mxu0 0
      %333 = vmatprep.mubr.bf16.mxu0 0
      %334 = vmatmul.mubr.bf16.gmra.mxu0 %v299
      %v335 = vpop.f32.mrf.mxu0
      %v336 = vadd.f32 0.0, %v335
      %v337 = vpop.f32.mrf.mxu0
      %v338 = vpop.f32.mrf.mxu0
      %v339 = vpop.f32.mrf.mxu0
      %340 = vdwg.mxu0
      %v341 = vadd.f32 %v280, %v336
      %v342 = vld [vmem:[%s250] sm:$0xf]
      %v343 = vunpack.c.l.bf16 %v342
      %v344 = vld [vmem:[%s3] sm:$0xf]
      %v345 = vld [vmem:[%s3 + $0x4] sm:$0xf]
      %v346 = vld [vmem:[%s3 + $0x8] sm:$0xf]
      %v347 = vld [vmem:[%s3 + $0xc] sm:$0xf]
      %v352 = vunpack.c.l.b16 %v344
      %v353 = vunpack.c.l.b16 %v345
      %v354 = vunpack.c.l.b16 %v346
      %v355 = vunpack.c.l.b16 %v347
      %v356 = vpack.c.b16 %v353, %v352
      %v357 = vpack.c.b16 %v355, %v354
      %v361 = vsel %vm297, %v277, 0
      %363 = vmatprep.subr.bf16.mxu0 0
      %364 = vmatpush1.bf16.msra.mxu0 0
      %365 = vmatprep.subr.bf16.mxu0 0
      %366 = vmatpush1.bf16.msra.mxu0 0
      %367 = vmatprep.subr.bf16.mxu0 0
      %368 = vmatpush1.bf16.msra.mxu0 0
      %369 = vmatprep.subr.bf16.mxu0 0
      %370 = vmatpush1.bf16.msra.mxu0 0
      %371 = vmatprep.subr.bf16.mxu0 0
      %372 = vmatpush1.bf16.msra.mxu0 0
      %373 = vmatprep.subr.bf16.mxu0 0
      %374 = vmatpush1.bf16.msra.mxu0 0
      %375 = vmatprep.subr.bf16.mxu0 0
      %376 = vmatpush1.bf16.msra.mxu0 %v357
      %377 = vmatprep.subr.bf16.mxu0 0
      %378 = vmatpush1.bf16.msra.mxu0 %v356
      %379 = vmatprep.subr.bf16.mxu0 0
      %380 = vmatpush2.bf16.msra.mxu0 0
      %381 = vmatprep.subr.bf16.mxu0 0
      %382 = vmatpush2.bf16.msra.mxu0 0
      %383 = vmatprep.subr.bf16.mxu0 0
      %384 = vmatpush2.bf16.msra.mxu0 0
      %385 = vmatprep.subr.bf16.mxu0 0
      %386 = vmatpush2.bf16.msra.mxu0 0
      %387 = vmatprep.subr.bf16.mxu0 0
      %388 = vmatpush2.bf16.msra.mxu0 0
      %389 = vmatprep.subr.bf16.mxu0 0
      %390 = vmatpush2.bf16.msra.mxu0 0
      %391 = vmatprep.subr.bf16.mxu0 0
      %392 = vmatpush2.bf16.msra.mxu0 0
      %393 = vmatprep.subr.bf16.mxu0 0
      %394 = vmatpush2.bf16.msra.mxu0 0
      %395 = vmatprep.mubr.bf16.mxu0 0
      %396 = vmatmul.mubr.bf16.gmra.mxu0 %v361
      %v397 = vpop.f32.mrf.mxu0
      %v398 = vadd.f32 0.0, %v397
      %v399 = vpop.f32.mrf.mxu0
      %v400 = vpop.f32.mrf.mxu0
      %v401 = vpop.f32.mrf.mxu0
      %402 = vdwg.mxu0
      %v403 = vadd.f32 %v343, %v398
      %v404 = vxor.u32 %v341, 2147483648
      %v405 = vmul.f32 %v404, 1.442695
      %v406 = vpow.pop %v405
      %v407 = vadd.f32 %v406, 1.0
      %v408 = vrcp.pop %v407
      %v409 = vmul.f32 1.0, %v408
      %v410 = vtanh.pop %v341
      %412 = vrot.lane.b32.xlu0 %v276, 32
      %v413 = vpop.permute.xlu0 %412
      %v415 = vmul.f32 %v409, %v413
      %417 = vrot.lane.b32.xlu0 %v410, 64
      %v418 = vpop.permute.xlu0 %417
      %v420 = vmul.f32 %v409, %v418
      %422 = vrot.lane.b32.xlu0 %v420, 32
      %v423 = vpop.permute.xlu0 %422
      %v425 = vadd.f32 %v415, %v423
      %v426 = vtanh.pop %v425
      %428 = vrot.lane.b32.xlu0 %v426, 64
      %v429 = vpop.permute.xlu0 %428
      %v431 = vmul.f32 %v409, %v429
      %v432 = vpack.c.bf16 %v431, %v431
      %v433 = vxor.u32 %v403, 2147483648
      %v434 = vmul.f32 %v433, 1.442695
      %v435 = vpow.pop %v434
      %v436 = vadd.f32 %v435, 1.0
      %v437 = vrcp.pop %v436
      %v438 = vmul.f32 1.0, %v437
      %v439 = vtanh.pop %v403
      %441 = vrot.lane.b32.xlu0 %v278, 32
      %v442 = vpop.permute.xlu0 %441
      %v444 = vmul.f32 %v438, %v442
      %446 = vrot.lane.b32.xlu0 %v439, 64
      %v447 = vpop.permute.xlu0 %446
      %v449 = vmul.f32 %v438, %v447
      %451 = vrot.lane.b32.xlu0 %v449, 32
      %v452 = vpop.permute.xlu0 %451
      %v454 = vadd.f32 %v444, %v452
      %v455 = vtanh.pop %v454
      %457 = vrot.lane.b32.xlu0 %v455, 64
      %v458 = vpop.permute.xlu0 %457
      %v460 = vmul.f32 %v438, %v458
      %v461 = vpack.c.bf16 %v460, %v460
      %v463 = vunpack.c.l.b16 %v432
      %v464 = vpack.c.b16 %v463, %v463
      %465 = vrot.lane.b32.xlu0 %v464, 32
      %v466 = vpop.permute.xlu0 %465
      %vm468 = vcmask 257024
      %469 = vst.msk [vmem:[%s256] sm:$0xf] %vm468, %v466
      %v471 = vunpack.c.l.b16 %v461
      %v472 = vpack.c.b16 %v471, %v471
      %473 = vrot.lane.b32.xlu0 %v472, 32
      %v474 = vpop.permute.xlu0 %473
      %476 = vst.msk [vmem:[%s262] sm:$0xf] %vm468, %v474
      %s477 = scalar_lea.vmem %s244, 4
      %v478 = vld [vmem:[%s477] sm:$0xf]
      %v479 = vunpack.c.l.bf16 %v478
      %v480 = vld [vmem:[%s2] sm:$0xf]
      %v481 = vld [vmem:[%s2 + $0x4] sm:$0xf]
      %v482 = vld [vmem:[%s2 + $0x8] sm:$0xf]
      %v483 = vld [vmem:[%s2 + $0xc] sm:$0xf]
      %484 = vrot.lane.b32.xlu0 %v432, 32
      %v485 = vpop.permute.xlu0 %484
      %v490 = vunpack.c.l.b16 %v480
      %v491 = vunpack.c.l.b16 %v481
      %v492 = vunpack.c.l.b16 %v482
      %v493 = vunpack.c.l.b16 %v483
      %v494 = vpack.c.b16 %v491, %v490
      %v495 = vpack.c.b16 %v493, %v492
      %v499 = vsel %vm297, %v485, 0
      %501 = vmatprep.subr.bf16.mxu0 0
      %502 = vmatpush1.bf16.msra.mxu0 0
      %503 = vmatprep.subr.bf16.mxu0 0
      %504 = vmatpush1.bf16.msra.mxu0 0
      %505 = vmatprep.subr.bf16.mxu0 0
      %506 = vmatpush1.bf16.msra.mxu0 0
      %507 = vmatprep.subr.bf16.mxu0 0
      %508 = vmatpush1.bf16.msra.mxu0 0
      %509 = vmatprep.subr.bf16.mxu0 0
      %510 = vmatpush1.bf16.msra.mxu0 0
      %511 = vmatprep.subr.bf16.mxu0 0
      %512 = vmatpush1.bf16.msra.mxu0 0
      %513 = vmatprep.subr.bf16.mxu0 0
      %514 = vmatpush1.bf16.msra.mxu0 %v495
      %515 = vmatprep.subr.bf16.mxu0 0
      %516 = vmatpush1.bf16.msra.mxu0 %v494
      %517 = vmatprep.subr.bf16.mxu0 0
      %518 = vmatpush2.bf16.msra.mxu0 0
      %519 = vmatprep.subr.bf16.mxu0 0
      %520 = vmatpush2.bf16.msra.mxu0 0
      %521 = vmatprep.subr.bf16.mxu0 0
      %522 = vmatpush2.bf16.msra.mxu0 0
      %523 = vmatprep.subr.bf16.mxu0 0
      %524 = vmatpush2.bf16.msra.mxu0 0
      %525 = vmatprep.subr.bf16.mxu0 0
      %526 = vmatpush2.bf16.msra.mxu0 0
      %527 = vmatprep.subr.bf16.mxu0 0
      %528 = vmatpush2.bf16.msra.mxu0 0
      %529 = vmatprep.subr.bf16.mxu0 0
      %530 = vmatpush2.bf16.msra.mxu0 0
      %531 = vmatprep.subr.bf16.mxu0 0
      %532 = vmatpush2.bf16.msra.mxu0 0
      %533 = vmatprep.mubr.bf16.mxu0 0
      %534 = vmatmul.mubr.bf16.gmra.mxu0 %v499
      %v535 = vpop.f32.mrf.mxu0
      %v536 = vadd.f32 0.0, %v535
      %v537 = vpop.f32.mrf.mxu0
      %v538 = vpop.f32.mrf.mxu0
      %v539 = vpop.f32.mrf.mxu0
      %540 = vdwg.mxu0
      %v541 = vadd.f32 %v479, %v536
      %s542 = scalar_lea.vmem %s250, 4
      %v543 = vld [vmem:[%s542] sm:$0xf]
      %v544 = vunpack.c.l.bf16 %v543
      %v545 = vld [vmem:[%s3] sm:$0xf]
      %v546 = vld [vmem:[%s3 + $0x4] sm:$0xf]
      %v547 = vld [vmem:[%s3 + $0x8] sm:$0xf]
      %v548 = vld [vmem:[%s3 + $0xc] sm:$0xf]
      %549 = vrot.lane.b32.xlu0 %v461, 32
      %v550 = vpop.permute.xlu0 %549
      %v555 = vunpack.c.l.b16 %v545
      %v556 = vunpack.c.l.b16 %v546
      %v557 = vunpack.c.l.b16 %v547
      %v558 = vunpack.c.l.b16 %v548
      %v559 = vpack.c.b16 %v556, %v555
      %v560 = vpack.c.b16 %v558, %v557
      %v564 = vsel %vm297, %v550, 0
      %566 = vmatprep.subr.bf16.mxu0 0
      %567 = vmatpush1.bf16.msra.mxu0 0
      %568 = vmatprep.subr.bf16.mxu0 0
      %569 = vmatpush1.bf16.msra.mxu0 0
      %570 = vmatprep.subr.bf16.mxu0 0
      %571 = vmatpush1.bf16.msra.mxu0 0
      %572 = vmatprep.subr.bf16.mxu0 0
      %573 = vmatpush1.bf16.msra.mxu0 0
      %574 = vmatprep.subr.bf16.mxu0 0
      %575 = vmatpush1.bf16.msra.mxu0 0
      %576 = vmatprep.subr.bf16.mxu0 0
      %577 = vmatpush1.bf16.msra.mxu0 0
      %578 = vmatprep.subr.bf16.mxu0 0
      %579 = vmatpush1.bf16.msra.mxu0 %v560
      %580 = vmatprep.subr.bf16.mxu0 0
      %581 = vmatpush1.bf16.msra.mxu0 %v559
      %582 = vmatprep.subr.bf16.mxu0 0
      %583 = vmatpush2.bf16.msra.mxu0 0
      %584 = vmatprep.subr.bf16.mxu0 0
      %585 = vmatpush2.bf16.msra.mxu0 0
      %586 = vmatprep.subr.bf16.mxu0 0
      %587 = vmatpush2.bf16.msra.mxu0 0
      %588 = vmatprep.subr.bf16.mxu0 0
      %589 = vmatpush2.bf16.msra.mxu0 0
      %590 = vmatprep.subr.bf16.mxu0 0
      %591 = vmatpush2.bf16.msra.mxu0 0
      %592 = vmatprep.subr.bf16.mxu0 0
      %593 = vmatpush2.bf16.msra.mxu0 0
      %594 = vmatprep.subr.bf16.mxu0 0
      %595 = vmatpush2.bf16.msra.mxu0 0
      %596 = vmatprep.subr.bf16.mxu0 0
      %597 = vmatpush2.bf16.msra.mxu0 0
      %598 = vmatprep.mubr.bf16.mxu0 0
      %599 = vmatmul.mubr.bf16.gmra.mxu0 %v564
      %v600 = vpop.f32.mrf.mxu0
      %v601 = vadd.f32 0.0, %v600
      %v602 = vpop.f32.mrf.mxu0
      %v603 = vpop.f32.mrf.mxu0
      %v604 = vpop.f32.mrf.mxu0
      %605 = vdwg.mxu0
      %v606 = vadd.f32 %v544, %v601
      %v607 = vxor.u32 %v541, 2147483648
      %v608 = vmul.f32 %v607, 1.442695
      %v609 = vpow.pop %v608
      %v610 = vadd.f32 %v609, 1.0
      %v611 = vrcp.pop %v610
      %v612 = vmul.f32 1.0, %v611
      %v613 = vtanh.pop %v541
      %v614 = vmul.f32 %v612, %v425
      %616 = vrot.lane.b32.xlu0 %v613, 64
      %v617 = vpop.permute.xlu0 %616
      %v619 = vmul.f32 %v612, %v617
      %621 = vrot.lane.b32.xlu0 %v619, 32
      %v622 = vpop.permute.xlu0 %621
      %v624 = vadd.f32 %v614, %v622
      %v625 = vtanh.pop %v624
      %627 = vrot.lane.b32.xlu0 %v625, 64
      %v628 = vpop.permute.xlu0 %627
      %v630 = vmul.f32 %v612, %v628
      %v631 = vpack.c.bf16 %v630, %v630
      %v632 = vxor.u32 %v606, 2147483648
      %v633 = vmul.f32 %v632, 1.442695
      %v634 = vpow.pop %v633
      %v635 = vadd.f32 %v634, 1.0
      %v636 = vrcp.pop %v635
      %v637 = vmul.f32 1.0, %v636
      %v638 = vtanh.pop %v606
      %v639 = vmul.f32 %v637, %v454
      %641 = vrot.lane.b32.xlu0 %v638, 64
      %v642 = vpop.permute.xlu0 %641
      %v644 = vmul.f32 %v637, %v642
      %646 = vrot.lane.b32.xlu0 %v644, 32
      %v647 = vpop.permute.xlu0 %646
      %v649 = vadd.f32 %v639, %v647
      %v650 = vtanh.pop %v649
      %652 = vrot.lane.b32.xlu0 %v650, 64
      %v653 = vpop.permute.xlu0 %652
      %v655 = vmul.f32 %v637, %v653
      %v656 = vpack.c.bf16 %v655, %v655
      %v658 = vunpack.c.l.b16 %v631
      %v659 = vpack.c.b16 %v658, %v658
      %660 = vrot.lane.b32.xlu0 %v659, 32
      %v661 = vpop.permute.xlu0 %660
      %s663 = scalar_lea.vmem %s256, 4
      %664 = vst.msk [vmem:[%s663] sm:$0xf] %vm468, %v661
      %v666 = vunpack.c.l.b16 %v656
      %v667 = vpack.c.b16 %v666, %v666
      %668 = vrot.lane.b32.xlu0 %v667, 32
      %v669 = vpop.permute.xlu0 %668
      %s671 = scalar_lea.vmem %s262, 4
      %672 = vst.msk [vmem:[%s671] sm:$0xf] %vm468, %v669
      %s673 = scalar_lea.vmem %s244, 8
      %v674 = vld [vmem:[%s673] sm:$0xf]
      %v675 = vunpack.c.l.bf16 %v674
      %v676 = vld [vmem:[%s2] sm:$0xf]
      %v677 = vld [vmem:[%s2 + $0x4] sm:$0xf]
      %v678 = vld [vmem:[%s2 + $0x8] sm:$0xf]
      %v679 = vld [vmem:[%s2 + $0xc] sm:$0xf]
      %680 = vrot.lane.b32.xlu0 %v631, 32
      %v681 = vpop.permute.xlu0 %680
      %v686 = vunpack.c.l.b16 %v676
      %v687 = vunpack.c.l.b16 %v677
      %v688 = vunpack.c.l.b16 %v678
      %v689 = vunpack.c.l.b16 %v679
      %v690 = vpack.c.b16 %v687, %v686
      %v691 = vpack.c.b16 %v689, %v688
      %v695 = vsel %vm297, %v681, 0
      %697 = vmatprep.subr.bf16.mxu0 0
      %698 = vmatpush1.bf16.msra.mxu0 0
      %699 = vmatprep.subr.bf16.mxu0 0
      %700 = vmatpush1.bf16.msra.mxu0 0
      %701 = vmatprep.subr.bf16.mxu0 0
      %702 = vmatpush1.bf16.msra.mxu0 0
      %703 = vmatprep.subr.bf16.mxu0 0
      %704 = vmatpush1.bf16.msra.mxu0 0
      %705 = vmatprep.subr.bf16.mxu0 0
      %706 = vmatpush1.bf16.msra.mxu0 0
      %707 = vmatprep.subr.bf16.mxu0 0
      %708 = vmatpush1.bf16.msra.mxu0 0
      %709 = vmatprep.subr.bf16.mxu0 0
      %710 = vmatpush1.bf16.msra.mxu0 %v691
      %711 = vmatprep.subr.bf16.mxu0 0
      %712 = vmatpush1.bf16.msra.mxu0 %v690
      %713 = vmatprep.subr.bf16.mxu0 0
      %714 = vmatpush2.bf16.msra.mxu0 0
      %715 = vmatprep.subr.bf16.mxu0 0
      %716 = vmatpush2.bf16.msra.mxu0 0
      %717 = vmatprep.subr.bf16.mxu0 0
      %718 = vmatpush2.bf16.msra.mxu0 0
      %719 = vmatprep.subr.bf16.mxu0 0
      %720 = vmatpush2.bf16.msra.mxu0 0
      %721 = vmatprep.subr.bf16.mxu0 0
      %722 = vmatpush2.bf16.msra.mxu0 0
      %723 = vmatprep.subr.bf16.mxu0 0
      %724 = vmatpush2.bf16.msra.mxu0 0
      %725 = vmatprep.subr.bf16.mxu0 0
      %726 = vmatpush2.bf16.msra.mxu0 0
      %727 = vmatprep.subr.bf16.mxu0 0
      %728 = vmatpush2.bf16.msra.mxu0 0
      %729 = vmatprep.mubr.bf16.mxu0 0
      %730 = vmatmul.mubr.bf16.gmra.mxu0 %v695
      %v731 = vpop.f32.mrf.mxu0
      %v732 = vadd.f32 0.0, %v731
      %v733 = vpop.f32.mrf.mxu0
      %v734 = vpop.f32.mrf.mxu0
      %v735 = vpop.f32.mrf.mxu0
      %736 = vdwg.mxu0
      %v737 = vadd.f32 %v675, %v732
      %s738 = scalar_lea.vmem %s250, 8
      %v739 = vld [vmem:[%s738] sm:$0xf]
      %v740 = vunpack.c.l.bf16 %v739
      %v741 = vld [vmem:[%s3] sm:$0xf]
      %v742 = vld [vmem:[%s3 + $0x4] sm:$0xf]
      %v743 = vld [vmem:[%s3 + $0x8] sm:$0xf]
      %v744 = vld [vmem:[%s3 + $0xc] sm:$0xf]
      %745 = vrot.lane.b32.xlu0 %v656, 32
      %v746 = vpop.permute.xlu0 %745
      %v751 = vunpack.c.l.b16 %v741
      %v752 = vunpack.c.l.b16 %v742
      %v753 = vunpack.c.l.b16 %v743
      %v754 = vunpack.c.l.b16 %v744
      %v755 = vpack.c.b16 %v752, %v751
      %v756 = vpack.c.b16 %v754, %v753
      %v760 = vsel %vm297, %v746, 0
      %762 = vmatprep.subr.bf16.mxu0 0
      %763 = vmatpush1.bf16.msra.mxu0 0
      %764 = vmatprep.subr.bf16.mxu0 0
      %765 = vmatpush1.bf16.msra.mxu0 0
      %766 = vmatprep.subr.bf16.mxu0 0
      %767 = vmatpush1.bf16.msra.mxu0 0
      %768 = vmatprep.subr.bf16.mxu0 0
      %769 = vmatpush1.bf16.msra.mxu0 0
      %770 = vmatprep.subr.bf16.mxu0 0
      %771 = vmatpush1.bf16.msra.mxu0 0
      %772 = vmatprep.subr.bf16.mxu0 0
      %773 = vmatpush1.bf16.msra.mxu0 0
      %774 = vmatprep.subr.bf16.mxu0 0
      %775 = vmatpush1.bf16.msra.mxu0 %v756
      %776 = vmatprep.subr.bf16.mxu0 0
      %777 = vmatpush1.bf16.msra.mxu0 %v755
      %778 = vmatprep.subr.bf16.mxu0 0
      %779 = vmatpush2.bf16.msra.mxu0 0
      %780 = vmatprep.subr.bf16.mxu0 0
      %781 = vmatpush2.bf16.msra.mxu0 0
      %782 = vmatprep.subr.bf16.mxu0 0
      %783 = vmatpush2.bf16.msra.mxu0 0
      %784 = vmatprep.subr.bf16.mxu0 0
      %785 = vmatpush2.bf16.msra.mxu0 0
      %786 = vmatprep.subr.bf16.mxu0 0
      %787 = vmatpush2.bf16.msra.mxu0 0
      %788 = vmatprep.subr.bf16.mxu0 0
      %789 = vmatpush2.bf16.msra.mxu0 0
      %790 = vmatprep.subr.bf16.mxu0 0
      %791 = vmatpush2.bf16.msra.mxu0 0
      %792 = vmatprep.subr.bf16.mxu0 0
      %793 = vmatpush2.bf16.msra.mxu0 0
      %794 = vmatprep.mubr.bf16.mxu0 0
      %795 = vmatmul.mubr.bf16.gmra.mxu0 %v760
      %v796 = vpop.f32.mrf.mxu0
      %v797 = vadd.f32 0.0, %v796
      %v798 = vpop.f32.mrf.mxu0
      %v799 = vpop.f32.mrf.mxu0
      %v800 = vpop.f32.mrf.mxu0
      %801 = vdwg.mxu0
      %v802 = vadd.f32 %v740, %v797
      %v803 = vxor.u32 %v737, 2147483648
      %v804 = vmul.f32 %v803, 1.442695
      %v805 = vpow.pop %v804
      %v806 = vadd.f32 %v805, 1.0
      %v807 = vrcp.pop %v806
      %v808 = vmul.f32 1.0, %v807
      %v809 = vtanh.pop %v737
      %v810 = vmul.f32 %v808, %v624
      %812 = vrot.lane.b32.xlu0 %v809, 64
      %v813 = vpop.permute.xlu0 %812
      %v815 = vmul.f32 %v808, %v813
      %817 = vrot.lane.b32.xlu0 %v815, 32
      %v818 = vpop.permute.xlu0 %817
      %v820 = vadd.f32 %v810, %v818
      %v821 = vtanh.pop %v820
      %823 = vrot.lane.b32.xlu0 %v821, 64
      %v824 = vpop.permute.xlu0 %823
      %v826 = vmul.f32 %v808, %v824
      %v827 = vpack.c.bf16 %v826, %v826
      %v828 = vxor.u32 %v802, 2147483648
      %v829 = vmul.f32 %v828, 1.442695
      %v830 = vpow.pop %v829
      %v831 = vadd.f32 %v830, 1.0
      %v832 = vrcp.pop %v831
      %v833 = vmul.f32 1.0, %v832
      %v834 = vtanh.pop %v802
      %v835 = vmul.f32 %v833, %v649
      %837 = vrot.lane.b32.xlu0 %v834, 64
      %v838 = vpop.permute.xlu0 %837
      %v840 = vmul.f32 %v833, %v838
      %842 = vrot.lane.b32.xlu0 %v840, 32
      %v843 = vpop.permute.xlu0 %842
      %v845 = vadd.f32 %v835, %v843
      %v846 = vtanh.pop %v845
      %848 = vrot.lane.b32.xlu0 %v846, 64
      %v849 = vpop.permute.xlu0 %848
      %v851 = vmul.f32 %v833, %v849
      %v852 = vpack.c.bf16 %v851, %v851
      %v854 = vunpack.c.l.b16 %v827
      %v855 = vpack.c.b16 %v854, %v854
      %856 = vrot.lane.b32.xlu0 %v855, 32
      %v857 = vpop.permute.xlu0 %856
      %s859 = scalar_lea.vmem %s256, 8
      %860 = vst.msk [vmem:[%s859] sm:$0xf] %vm468, %v857
      %v862 = vunpack.c.l.b16 %v852
      %v863 = vpack.c.b16 %v862, %v862
      %864 = vrot.lane.b32.xlu0 %v863, 32
      %v865 = vpop.permute.xlu0 %864
      %s867 = scalar_lea.vmem %s262, 8
      %868 = vst.msk [vmem:[%s867] sm:$0xf] %vm468, %v865
      %s869 = scalar_lea.vmem %s244, 12
      %v870 = vld [vmem:[%s869] sm:$0xf]
      %v871 = vunpack.c.l.bf16 %v870
      %v872 = vld [vmem:[%s2] sm:$0xf]
      %v873 = vld [vmem:[%s2 + $0x4] sm:$0xf]
      %v874 = vld [vmem:[%s2 + $0x8] sm:$0xf]
      %v875 = vld [vmem:[%s2 + $0xc] sm:$0xf]
      %876 = vrot.lane.b32.xlu0 %v827, 32
      %v877 = vpop.permute.xlu0 %876
      %v882 = vunpack.c.l.b16 %v872
      %v883 = vunpack.c.l.b16 %v873
      %v884 = vunpack.c.l.b16 %v874
      %v885 = vunpack.c.l.b16 %v875
      %v886 = vpack.c.b16 %v883, %v882
      %v887 = vpack.c.b16 %v885, %v884
      %v891 = vsel %vm297, %v877, 0
      %893 = vmatprep.subr.bf16.mxu0 0
      %894 = vmatpush1.bf16.msra.mxu0 0
      %895 = vmatprep.subr.bf16.mxu0 0
      %896 = vmatpush1.bf16.msra.mxu0 0
      %897 = vmatprep.subr.bf16.mxu0 0
      %898 = vmatpush1.bf16.msra.mxu0 0
      %899 = vmatprep.subr.bf16.mxu0 0
      %900 = vmatpush1.bf16.msra.mxu0 0
      %901 = vmatprep.subr.bf16.mxu0 0
      %902 = vmatpush1.bf16.msra.mxu0 0
      %903 = vmatprep.subr.bf16.mxu0 0
      %904 = vmatpush1.bf16.msra.mxu0 0
      %905 = vmatprep.subr.bf16.mxu0 0
      %906 = vmatpush1.bf16.msra.mxu0 %v887
      %907 = vmatprep.subr.bf16.mxu0 0
      %908 = vmatpush1.bf16.msra.mxu0 %v886
      %909 = vmatprep.subr.bf16.mxu0 0
      %910 = vmatpush2.bf16.msra.mxu0 0
      %911 = vmatprep.subr.bf16.mxu0 0
      %912 = vmatpush2.bf16.msra.mxu0 0
      %913 = vmatprep.subr.bf16.mxu0 0
      %914 = vmatpush2.bf16.msra.mxu0 0
      %915 = vmatprep.subr.bf16.mxu0 0
      %916 = vmatpush2.bf16.msra.mxu0 0
      %917 = vmatprep.subr.bf16.mxu0 0
      %918 = vmatpush2.bf16.msra.mxu0 0
      %919 = vmatprep.subr.bf16.mxu0 0
      %920 = vmatpush2.bf16.msra.mxu0 0
      %921 = vmatprep.subr.bf16.mxu0 0
      %922 = vmatpush2.bf16.msra.mxu0 0
      %923 = vmatprep.subr.bf16.mxu0 0
      %924 = vmatpush2.bf16.msra.mxu0 0
      %925 = vmatprep.mubr.bf16.mxu0 0
      %926 = vmatmul.mubr.bf16.gmra.mxu0 %v891
      %v927 = vpop.f32.mrf.mxu0
      %v928 = vadd.f32 0.0, %v927
      %v929 = vpop.f32.mrf.mxu0
      %v930 = vpop.f32.mrf.mxu0
      %v931 = vpop.f32.mrf.mxu0
      %932 = vdwg.mxu0
      %v933 = vadd.f32 %v871, %v928
      %s934 = scalar_lea.vmem %s250, 12
      %v935 = vld [vmem:[%s934] sm:$0xf]
      %v936 = vunpack.c.l.bf16 %v935
      %v937 = vld [vmem:[%s3] sm:$0xf]
      %v938 = vld [vmem:[%s3 + $0x4] sm:$0xf]
      %v939 = vld [vmem:[%s3 + $0x8] sm:$0xf]
      %v940 = vld [vmem:[%s3 + $0xc] sm:$0xf]
      %941 = vrot.lane.b32.xlu0 %v852, 32
      %v942 = vpop.permute.xlu0 %941
      %v947 = vunpack.c.l.b16 %v937
      %v948 = vunpack.c.l.b16 %v938
      %v949 = vunpack.c.l.b16 %v939
      %v950 = vunpack.c.l.b16 %v940
      %v951 = vpack.c.b16 %v948, %v947
      %v952 = vpack.c.b16 %v950, %v949
      %v956 = vsel %vm297, %v942, 0
      %958 = vmatprep.subr.bf16.mxu0 0
      %959 = vmatpush1.bf16.msra.mxu0 0
      %960 = vmatprep.subr.bf16.mxu0 0
      %961 = vmatpush1.bf16.msra.mxu0 0
      %962 = vmatprep.subr.bf16.mxu0 0
      %963 = vmatpush1.bf16.msra.mxu0 0
      %964 = vmatprep.subr.bf16.mxu0 0
      %965 = vmatpush1.bf16.msra.mxu0 0
      %966 = vmatprep.subr.bf16.mxu0 0
      %967 = vmatpush1.bf16.msra.mxu0 0
      %968 = vmatprep.subr.bf16.mxu0 0
      %969 = vmatpush1.bf16.msra.mxu0 0
      %970 = vmatprep.subr.bf16.mxu0 0
      %971 = vmatpush1.bf16.msra.mxu0 %v952
      %972 = vmatprep.subr.bf16.mxu0 0
      %973 = vmatpush1.bf16.msra.mxu0 %v951
      %974 = vmatprep.subr.bf16.mxu0 0
      %975 = vmatpush2.bf16.msra.mxu0 0
      %976 = vmatprep.subr.bf16.mxu0 0
      %977 = vmatpush2.bf16.msra.mxu0 0
      %978 = vmatprep.subr.bf16.mxu0 0
      %979 = vmatpush2.bf16.msra.mxu0 0
      %980 = vmatprep.subr.bf16.mxu0 0
      %981 = vmatpush2.bf16.msra.mxu0 0
      %982 = vmatprep.subr.bf16.mxu0 0
      %983 = vmatpush2.bf16.msra.mxu0 0
      %984 = vmatprep.subr.bf16.mxu0 0
      %985 = vmatpush2.bf16.msra.mxu0 0
      %986 = vmatprep.subr.bf16.mxu0 0
      %987 = vmatpush2.bf16.msra.mxu0 0
      %988 = vmatprep.subr.bf16.mxu0 0
      %989 = vmatpush2.bf16.msra.mxu0 0
      %990 = vmatprep.mubr.bf16.mxu0 0
      %991 = vmatmul.mubr.bf16.gmra.mxu0 %v956
      %v992 = vpop.f32.mrf.mxu0
      %v993 = vadd.f32 0.0, %v992
      %v994 = vpop.f32.mrf.mxu0
      %v995 = vpop.f32.mrf.mxu0
      %v996 = vpop.f32.mrf.mxu0
      %997 = vdwg.mxu0
      %v998 = vadd.f32 %v936, %v993
      %v999 = vxor.u32 %v933, 2147483648
      %v1000 = vmul.f32 %v999, 1.442695
      %v1001 = vpow.pop %v1000
      %v1002 = vadd.f32 %v1001, 1.0
      %v1003 = vrcp.pop %v1002
      %v1004 = vmul.f32 1.0, %v1003
      %v1005 = vtanh.pop %v933
      %v1006 = vmul.f32 %v1004, %v820
      %1008 = vrot.lane.b32.xlu0 %v1005, 64
      %v1009 = vpop.permute.xlu0 %1008
      %v1011 = vmul.f32 %v1004, %v1009
      %1013 = vrot.lane.b32.xlu0 %v1011, 32
      %v1014 = vpop.permute.xlu0 %1013
      %v1016 = vadd.f32 %v1006, %v1014
      %v1017 = vtanh.pop %v1016
      %1019 = vrot.lane.b32.xlu0 %v1017, 64
      %v1020 = vpop.permute.xlu0 %1019
      %v1022 = vmul.f32 %v1004, %v1020
      %v1023 = vpack.c.bf16 %v1022, %v1022
      %v1024 = vxor.u32 %v998, 2147483648
      %v1025 = vmul.f32 %v1024, 1.442695
      %v1026 = vpow.pop %v1025
      %v1027 = vadd.f32 %v1026, 1.0
      %v1028 = vrcp.pop %v1027
      %v1029 = vmul.f32 1.0, %v1028
      %v1030 = vtanh.pop %v998
      %v1031 = vmul.f32 %v1029, %v845
      %1033 = vrot.lane.b32.xlu0 %v1030, 64
      %v1034 = vpop.permute.xlu0 %1033
      %v1036 = vmul.f32 %v1029, %v1034
      %1038 = vrot.lane.b32.xlu0 %v1036, 32
      %v1039 = vpop.permute.xlu0 %1038
      %v1041 = vadd.f32 %v1031, %v1039
      %v1042 = vtanh.pop %v1041
      %1044 = vrot.lane.b32.xlu0 %v1042, 64
      %v1045 = vpop.permute.xlu0 %1044
      %v1047 = vmul.f32 %v1029, %v1045
      %v1048 = vpack.c.bf16 %v1047, %v1047
      %v1050 = vunpack.c.l.b16 %v1023
      %v1051 = vpack.c.b16 %v1050, %v1050
      %1052 = vrot.lane.b32.xlu0 %v1051, 32
      %v1053 = vpop.permute.xlu0 %1052
      %s1055 = scalar_lea.vmem %s256, 12
      %1056 = vst.msk [vmem:[%s1055] sm:$0xf] %vm468, %v1053
      %v1058 = vunpack.c.l.b16 %v1048
      %v1059 = vpack.c.b16 %v1058, %v1058
      %1060 = vrot.lane.b32.xlu0 %v1059, 32
      %v1061 = vpop.permute.xlu0 %1060
      %s1063 = scalar_lea.vmem %s262, 12
      %1064 = vst.msk [vmem:[%s1063] sm:$0xf] %vm468, %v1061
      %1065 = vst.msk [vmem:[#allocation2] sm:$0xf] %vm468, %v1053
      %1067 = vrot.lane.b32.xlu0 %v1016, 96
      %v1068 = vpop.permute.xlu0 %1067
      %1070 = vst.msk [vmem:[#allocation3] sm:$0xff] %vm297, %v1068
      %1071 = vst.msk [vmem:[#allocation4] sm:$0xf] %vm468, %v1061
      %1073 = vrot.lane.b32.xlu0 %v1041, 96
      %v1074 = vpop.permute.xlu0 %1073
      %1076 = vst.msk [vmem:[#allocation5] sm:$0xff] %vm297, %v1074
      %s1077 = smul.u32 4, %s17
      %p1078 = scmp.lt.s32.totalorder %s1077, 7
      %s1079 = scalar_select %p1078, %s1077, 7
      %s1080 = smul.addr %s1079, 4
      %s1081 = scalar_lea.vmem %s4, %s1080
      %s1082 = smul.u32 4, %s17
      %p1083 = scmp.lt.s32.totalorder %s1082, 7
      %s1084 = scalar_select %p1083, %s1082, 7
      %s1085 = smul.addr %s1084, 4
      %s1086 = scalar_lea.vmem %s5, %s1085
      // Predicated region
      $region41: #{bilstm_forward.2} parent=35 // pred_check
        %p1087 = pneg %p129
      $region42: #{bilstm_forward.2} parent=35 // pred_check_branch
        %1089 = sbr.rel (%p1087) target = $region44
      $region43: #{bilstm_forward.2} parent=35 // pred_region
        %s1090 = smul.u32 4, %s17
      $region44: #{bilstm_forward.2} parent=35 // pred_fallthru
        _
      // Predicated region
      $region45: #{bilstm_forward.2} parent=35 // pred_check
        %p1091 = pneg %p155
      $region46: #{bilstm_forward.2} parent=35 // pred_check_branch
        %1093 = sbr.rel (%p1091) target = $region48
      $region47: #{bilstm_forward.2} parent=35 // pred_region
        %s1094 = smul.u32 4, %s17
      $region48: #{bilstm_forward.2} parent=35 // pred_fallthru
        _
    $region36: #{bilstm_forward.2} parent=5 // pred_fallthru
      _
    %p1095 = scmp.le.s32.totalorder 2, %s12
    // Predicated region
    $region49: #{bilstm_forward.2} parent=5 // pred_check
      %p1096 = pneg %p1095
    $region50: #{bilstm_forward.2} parent=5 // pred_check_branch
      %1098 = sbr.rel (%p1096) target = $region52
    $region51: #{bilstm_forward.2} parent=5 // pred_region
      %s1099 = ssub.s32 %s12, 2
      // Predicated region
      $region53: #{bilstm_forward.2} parent=51 // pred_check
        %p1100 = pneg %p135
      $region54: #{bilstm_forward.2} parent=51 // pred_check_branch
        %1102 = sbr.rel (%p1100) target = $region56
      $region55: #{bilstm_forward.2} parent=51 // pred_region
        %s1103 = smul.u32 4, %s18
        %p1104 = scmp.lt.s32.totalorder %s1103, 7
        %s1105 = scalar_select %p1104, %s1103, 7
        %s1106 = smul.addr %s1105, 4
        %s1107 = scalar_lea.vmem %s4, %s1106
      $region56: #{bilstm_forward.2} parent=51 // pred_fallthru
        _
      // Predicated region
      $region57: #{bilstm_forward.2} parent=51 // pred_check
        %p1108 = pneg %p161
      $region58: #{bilstm_forward.2} parent=51 // pred_check_branch
        %1110 = sbr.rel (%p1108) target = $region60
      $region59: #{bilstm_forward.2} parent=51 // pred_region
        %s1111 = smul.u32 4, %s18
        %p1112 = scmp.lt.s32.totalorder %s1111, 7
        %s1113 = scalar_select %p1112, %s1111, 7
        %s1114 = smul.addr %s1113, 4
        %s1115 = scalar_lea.vmem %s5, %s1114
      $region60: #{bilstm_forward.2} parent=51 // pred_fallthru
        _
    $region52: #{bilstm_forward.2} parent=5 // pred_fallthru
      _
  $region6: #{bilstm_forward.2} parent=0 // loop_footer
    %s16 = sadd.s32 1, %s12
  $region7: #{bilstm_forward.2} parent=0 // loop_footer_branch
    %11 = sbr.rel target = $region3
  $region8: #{bilstm_forward.2} parent=0 // loop_exit
    _

</llo_original>
